<compile_context>
chip_gen: v5e
topology: v5e:2x2
jax: 0.10.0
libtpu: 0.0.40
codegen_flags: <defaults>
</compile_context>

<pallas_src>
import functools

import jax
import jax.numpy as jnp
from jax import lax
from jax.experimental import pallas as pl
from jax.experimental.pallas import tpu as pltpu


def _leaky_relu(x, slope=0.01):
    return jnp.where(x > 0, x, slope * x)


# ----------------------------------------------------------------------------
# Fused kernel: stacked GRU (unrolled time loop) + last-step + 3-layer MLP.
# Single grid point; every operand is a whole-array VMEM block (total < 256 KiB).
# ----------------------------------------------------------------------------
def _fused_forward_kernel(n_layers, T, B, H, *refs):
    # refs layout:
    #   x_ref,
    #   per layer: (wi (D,3H), wh (H,3H), b_combined (1,3H), bhn (1,H)),
    #   mlp: w1, b1, w2, b2, w3_padded, b3_padded,
    #   o_ref
    idx = 0
    x_ref = refs[idx]; idx += 1
    layer_refs = []
    for _ in range(n_layers):
        layer_refs.append(refs[idx:idx + 4])
        idx += 4
    mw1, mb1, mw2, mb2, mw3, mb3 = refs[idx:idx + 6]
    idx += 6
    o_ref = refs[idx]

    x = x_ref[...].astype(jnp.float32)                       # (B, T, D)

    # Build a time-major (T*B, D) slab from static slices (no separate XLA transpose).
    cur_flat = jnp.concatenate([x[:, t, :] for t in range(T)], axis=0)

    h = jnp.zeros((B, H), jnp.float32)
    for li, (wi_ref, wh_ref, b_ref, bhn_ref) in enumerate(layer_refs):
        wi = wi_ref[...]                                      # (Din, 3H)
        wh = wh_ref[...]                                      # (H, 3H)
        b = b_ref[...]                                        # (1, 3H) = [bir+bhr, biz+bhz, bin]
        bhn = bhn_ref[...]                                    # (1, H)

        # Hoisted input projections for ALL timesteps: one wide matmul per layer.
        gi_flat = jnp.dot(cur_flat, wi, preferred_element_type=jnp.float32) + b  # (T*B, 3H)

        h = jnp.zeros((B, H), jnp.float32)
        outs = []
        for t in range(T):                                    # fully unrolled (T static, small)
            gi = gi_flat[t * B:(t + 1) * B, :]                # (B, 3H)
            gh = jnp.dot(h, wh, preferred_element_type=jnp.float32)  # ONE matmul on serial chain
            r = jax.nn.sigmoid(gi[:, :H] + gh[:, :H])
            z = jax.nn.sigmoid(gi[:, H:2 * H] + gh[:, H:2 * H])
            n = jnp.tanh(gi[:, 2 * H:] + r * (gh[:, 2 * H:] + bhn))
            h = (1.0 - z) * n + z * h
            if li < n_layers - 1:
                outs.append(h)
        if li < n_layers - 1:
            # Next layer's input sequence, kept entirely in values/VMEM (never hits HBM).
            cur_flat = jnp.concatenate(outs, axis=0)          # (T*B, H), time-major

    # MLP head on the last hidden state only.
    a = _leaky_relu(jnp.dot(h, mw1[...], preferred_element_type=jnp.float32) + mb1[...])
    a = _leaky_relu(jnp.dot(a, mw2[...], preferred_element_type=jnp.float32) + mb2[...])
    out = jnp.dot(a, mw3[...], preferred_element_type=jnp.float32) + mb3[...]   # (B, pad_out)
    o_ref[...] = out.astype(o_ref.dtype)                      # single lane-dense (B,128) store


# ----------------------------------------------------------------------------
# Parameter packing: fuse per-gate weights into the kernel layout (done once).
# ----------------------------------------------------------------------------
def prepare_kernel_params(gru_layers, mlp_params):
    flat = []
    for p in gru_layers:
        wi = jnp.concatenate([p["wir"], p["wiz"], p["win"]], axis=1)          # (Din, 3H)
        wh = jnp.concatenate([p["whr"], p["whz"], p["whn"]], axis=1)          # (H, 3H)
        # r/z biases can be pre-summed; bhn must stay separate (gated by r).
        b = jnp.concatenate([p["bir"] + p["bhr"],
                             p["biz"] + p["bhz"],
                             p["bin"]], axis=1)                               # (1, 3H)
        flat += [wi, wh, b, p["bhn"]]

    out_dim = mlp_params["w3"].shape[1]
    pad_out = pl.cdiv(out_dim, 128) * 128
    w3p = jnp.pad(mlp_params["w3"], ((0, 0), (0, pad_out - out_dim)))
    b3p = jnp.pad(mlp_params["b3"], ((0, 0), (0, pad_out - out_dim)))
    flat += [mlp_params["w1"], mlp_params["b1"],
             mlp_params["w2"], mlp_params["b2"], w3p, b3p]

    meta = {
        "n_layers": len(gru_layers),
        "H": gru_layers[0]["whr"].shape[0],
        "out_dim": out_dim,
        "pad_out": pad_out,
    }
    return flat, meta


# ----------------------------------------------------------------------------
# Full forward: one pallas_call, then slice padded lanes back to the true out_dim.
# ----------------------------------------------------------------------------
def recurrent_wrapper_forward(x, flat_params, meta):
    B, T, _ = x.shape
    n_layers, H = meta["n_layers"], meta["H"]
    pad_out, out_dim = meta["pad_out"], meta["out_dim"]

    kernel = functools.partial(_fused_forward_kernel, n_layers, T, B, H)
    out_padded = pl.pallas_call(
        kernel,
        out_shape=jax.ShapeDtypeStruct((B, pad_out), jnp.float32),
    )(x, *flat_params)
    return out_padded[:, :out_dim]


# ----------------------------------------------------------------------------
# Deterministic parameter init (PyTorch-style uniform(-1/sqrt(H), 1/sqrt(H))),
# stored per-gate & pre-transposed to (in, out).
# ----------------------------------------------------------------------------
def init_params(key, in_dim, latent_dim, n_layers, mlp_in_dim, mlp_out_dim, mlp_hidden):
    H = latent_dim

    def unif(k, shape, scale):
        return jax.random.uniform(k, shape, jnp.float32, -scale, scale)

    gru_layers = []
    for l in range(n_layers):
        d = in_dim if l == 0 else H
        key, *ks = jax.random.split(key, 13)
        s = 1.0 / jnp.sqrt(H)
        layer = {
            "wir": unif(ks[0], (d, H), s), "wiz": unif(ks[1], (d, H), s), "win": unif(ks[2], (d, H), s),
            "whr": unif(ks[3], (H, H), s), "whz": unif(ks[4], (H, H), s), "whn": unif(ks[5], (H, H), s),
            "bir": unif(ks[6], (1, H), s), "biz": unif(ks[7], (1, H), s), "bin": unif(ks[8], (1, H), s),
            "bhr": unif(ks[9], (1, H), s), "bhz": unif(ks[10], (1, H), s), "bhn": unif(ks[11], (1, H), s),
        }
        gru_layers.append(layer)

    dims = [mlp_in_dim] + list(mlp_hidden) + [mlp_out_dim]
    key, *ks = jax.random.split(key, 7)
    mlp_params = {}
    for i in range(3):
        s = 1.0 / jnp.sqrt(dims[i])
        mlp_params[f"w{i+1}"] = unif(ks[2 * i], (dims[i], dims[i + 1]), s)
        mlp_params[f"b{i+1}"] = unif(ks[2 * i + 1], (1, dims[i + 1]), s)
    return gru_layers, mlp_params


# ----------------------------------------------------------------------------
# Pure-JAX reference (lax.scan GRU on the un-fused per-gate params).
# ----------------------------------------------------------------------------
def reference_forward(x, gru_layers, mlp_params):
    seq = jnp.transpose(x, (1, 0, 2))
    for p in gru_layers:
        B = seq.shape[1]
        H = p["whr"].shape[0]

        def step(h, xt):
            gi_r = xt @ p["wir"] + p["bir"]
            gi_z = xt @ p["wiz"] + p["biz"]
            gi_n = xt @ p["win"] + p["bin"]
            gh_r = h @ p["whr"] + p["bhr"]
            gh_z = h @ p["whz"] + p["bhz"]
            gh_n = h @ p["whn"] + p["bhn"]
            r = jax.nn.sigmoid(gi_r + gh_r)
            z = jax.nn.sigmoid(gi_z + gh_z)
            n = jnp.tanh(gi_n + r * gh_n)
            h_new = (1.0 - z) * n + z * h
            return h_new, h_new

        h0 = jnp.zeros((B, H), jnp.float32)
        _, seq = lax.scan(step, h0, seq)
    last = seq[-1]
    h1 = _leaky_relu(last @ mlp_params["w1"] + mlp_params["b1"])
    h2 = _leaky_relu(h1 @ mlp_params["w2"] + mlp_params["b2"])
    return h2 @ mlp_params["w3"] + mlp_params["b3"]


if __name__ == "__main__":
    # Small shapes consistent with the module's forward:
    batch, seq_len, in_dim = 8, 8, 16
    latent_dim, n_layers = 32, 2
    mlp_in_dim, mlp_out_dim, mlp_hidden = latent_dim, 19, (128, 128)

    key = jax.random.PRNGKey(0)
    key, xk = jax.random.split(key)
    x = jax.random.normal(xk, (batch, seq_len, in_dim), jnp.float32)

    gru_layers, mlp_params = init_params(
        key, in_dim, latent_dim, n_layers, mlp_in_dim, mlp_out_dim, mlp_hidden)

    # Fuse / pack parameters once (kernel-friendly layout).
    flat_params, meta = prepare_kernel_params(gru_layers, mlp_params)
    flat_params = [jax.block_until_ready(p) for p in flat_params]

    out = recurrent_wrapper_forward(x, flat_params, meta)
    out = jax.block_until_ready(out)

    ref = jax.block_until_ready(reference_forward(x, gru_layers, mlp_params))
    assert out.shape == (batch, mlp_out_dim), out.shape
    assert jnp.allclose(out, ref, rtol=2e-2, atol=2e-2), "mismatch vs JAX reference"

    print("KERNEL_OK")
</pallas_src>

<mosaic_0001>
module attributes {stable_mosaic.version = 11 : i64} {
  func.func @_fused_forward_kernel(%arg0: memref<8x8x16xf32, #tpu.memory_space<vmem>>, %arg1: memref<16x96xf32, #tpu.memory_space<vmem>>, %arg2: memref<32x96xf32, #tpu.memory_space<vmem>>, %arg3: memref<1x96xf32, #tpu.memory_space<vmem>>, %arg4: memref<1x32xf32, #tpu.memory_space<vmem>>, %arg5: memref<32x96xf32, #tpu.memory_space<vmem>>, %arg6: memref<32x96xf32, #tpu.memory_space<vmem>>, %arg7: memref<1x96xf32, #tpu.memory_space<vmem>>, %arg8: memref<1x32xf32, #tpu.memory_space<vmem>>, %arg9: memref<32x128xf32, #tpu.memory_space<vmem>>, %arg10: memref<1x128xf32, #tpu.memory_space<vmem>>, %arg11: memref<128x128xf32, #tpu.memory_space<vmem>>, %arg12: memref<1x128xf32, #tpu.memory_space<vmem>>, %arg13: memref<128x128xf32, #tpu.memory_space<vmem>>, %arg14: memref<1x128xf32, #tpu.memory_space<vmem>>, %arg15: memref<8x128xf32, #tpu.memory_space<vmem>>) attributes {dimension_semantics = [], scalar_prefetch = 0 : i64, scratch_operands = 0 : i64, tpu.core_type = #tpu.core_type<tc>} {
    %c0 = arith.constant 0 : index
    %c0_0 = arith.constant 0 : index
    %c0_1 = arith.constant 0 : index
    %0 = vector.load %arg0[%c0, %c0_0, %c0_1] : memref<8x8x16xf32, #tpu.memory_space<vmem>>, vector<8x8x16xf32>
    %1 = vector.extract_strided_slice %0 {offsets = [0, 0, 0], sizes = [8, 1, 16], strides = [1, 1, 1]} : vector<8x8x16xf32> to vector<8x1x16xf32>
    %2 = vector.shape_cast %1 : vector<8x1x16xf32> to vector<8x16xf32>
    %3 = vector.extract_strided_slice %0 {offsets = [0, 1, 0], sizes = [8, 1, 16], strides = [1, 1, 1]} : vector<8x8x16xf32> to vector<8x1x16xf32>
    %4 = vector.shape_cast %3 : vector<8x1x16xf32> to vector<8x16xf32>
    %5 = vector.extract_strided_slice %0 {offsets = [0, 2, 0], sizes = [8, 1, 16], strides = [1, 1, 1]} : vector<8x8x16xf32> to vector<8x1x16xf32>
    %6 = vector.shape_cast %5 : vector<8x1x16xf32> to vector<8x16xf32>
    %7 = vector.extract_strided_slice %0 {offsets = [0, 3, 0], sizes = [8, 1, 16], strides = [1, 1, 1]} : vector<8x8x16xf32> to vector<8x1x16xf32>
    %8 = vector.shape_cast %7 : vector<8x1x16xf32> to vector<8x16xf32>
    %9 = vector.extract_strided_slice %0 {offsets = [0, 4, 0], sizes = [8, 1, 16], strides = [1, 1, 1]} : vector<8x8x16xf32> to vector<8x1x16xf32>
    %10 = vector.shape_cast %9 : vector<8x1x16xf32> to vector<8x16xf32>
    %11 = vector.extract_strided_slice %0 {offsets = [0, 5, 0], sizes = [8, 1, 16], strides = [1, 1, 1]} : vector<8x8x16xf32> to vector<8x1x16xf32>
    %12 = vector.shape_cast %11 : vector<8x1x16xf32> to vector<8x16xf32>
    %13 = vector.extract_strided_slice %0 {offsets = [0, 6, 0], sizes = [8, 1, 16], strides = [1, 1, 1]} : vector<8x8x16xf32> to vector<8x1x16xf32>
    %14 = vector.shape_cast %13 : vector<8x1x16xf32> to vector<8x16xf32>
    %15 = vector.extract_strided_slice %0 {offsets = [0, 7, 0], sizes = [8, 1, 16], strides = [1, 1, 1]} : vector<8x8x16xf32> to vector<8x1x16xf32>
    %16 = vector.shape_cast %15 : vector<8x1x16xf32> to vector<8x16xf32>
    %17 = tpu.concatenate %2, %4, %6, %8, %10, %12, %14, %16 in 0 : vector<8x16xf32>, vector<8x16xf32>, vector<8x16xf32>, vector<8x16xf32>, vector<8x16xf32>, vector<8x16xf32>, vector<8x16xf32>, vector<8x16xf32> -> vector<64x16xf32>
    %c0_2 = arith.constant 0 : index
    %c0_3 = arith.constant 0 : index
    %18 = vector.load %arg1[%c0_2, %c0_3] : memref<16x96xf32, #tpu.memory_space<vmem>>, vector<16x96xf32>
    %c0_4 = arith.constant 0 : index
    %c0_5 = arith.constant 0 : index
    %19 = vector.load %arg2[%c0_4, %c0_5] : memref<32x96xf32, #tpu.memory_space<vmem>>, vector<32x96xf32>
    %c0_6 = arith.constant 0 : index
    %c0_7 = arith.constant 0 : index
    %20 = vector.load %arg3[%c0_6, %c0_7] : memref<1x96xf32, #tpu.memory_space<vmem>>, vector<1x96xf32>
    %c0_8 = arith.constant 0 : index
    %c0_9 = arith.constant 0 : index
    %21 = vector.load %arg4[%c0_8, %c0_9] : memref<1x32xf32, #tpu.memory_space<vmem>>, vector<1x32xf32>
    %cst = arith.constant dense<0.000000e+00> : vector<64x96xf32>
    %22 = tpu.matmul %17, %18, %cst {dimension_numbers = #tpu.dot_dimension_numbers<[1], [0], [0], [1], [0, 0, 1, 1], [], []>} : vector<64x16xf32>, vector<16x96xf32>, vector<64x96xf32> -> vector<64x96xf32>
    %23 = vector.broadcast %20 : vector<1x96xf32> to vector<64x96xf32>
    %24 = arith.addf %22, %23 : vector<64x96xf32>
    %cst_10 = arith.constant 0.000000e+00 : f32
    %25 = vector.broadcast %cst_10 : f32 to vector<8x32xf32>
    %26 = vector.extract_strided_slice %24 {offsets = [0, 0], sizes = [8, 96], strides = [1, 1]} : vector<64x96xf32> to vector<8x96xf32>
    %cst_11 = arith.constant dense<0.000000e+00> : vector<8x96xf32>
    %27 = tpu.matmul %25, %19, %cst_11 {dimension_numbers = #tpu.dot_dimension_numbers<[1], [0], [0], [1], [0, 0, 1, 1], [], []>} : vector<8x32xf32>, vector<32x96xf32>, vector<8x96xf32> -> vector<8x96xf32>
    %28 = vector.extract_strided_slice %26 {offsets = [0, 0], sizes = [8, 32], strides = [1, 1]} : vector<8x96xf32> to vector<8x32xf32>
    %29 = vector.extract_strided_slice %27 {offsets = [0, 0], sizes = [8, 32], strides = [1, 1]} : vector<8x96xf32> to vector<8x32xf32>
    %30 = arith.addf %28, %29 : vector<8x32xf32>
    %31 = arith.negf %30 : vector<8x32xf32>
    %32 = math.exp %31 : vector<8x32xf32>
    %cst_12 = arith.constant 1.000000e+00 : f32
    %33 = vector.broadcast %cst_12 : f32 to vector<8x32xf32>
    %34 = arith.addf %33, %32 : vector<8x32xf32>
    %35 = arith.divf %33, %34 : vector<8x32xf32>
    %36 = vector.extract_strided_slice %26 {offsets = [0, 32], sizes = [8, 32], strides = [1, 1]} : vector<8x96xf32> to vector<8x32xf32>
    %37 = vector.extract_strided_slice %27 {offsets = [0, 32], sizes = [8, 32], strides = [1, 1]} : vector<8x96xf32> to vector<8x32xf32>
    %38 = arith.addf %36, %37 : vector<8x32xf32>
    %39 = arith.negf %38 : vector<8x32xf32>
    %40 = math.exp %39 : vector<8x32xf32>
    %cst_13 = arith.constant 1.000000e+00 : f32
    %41 = vector.broadcast %cst_13 : f32 to vector<8x32xf32>
    %42 = arith.addf %41, %40 : vector<8x32xf32>
    %43 = arith.divf %41, %42 : vector<8x32xf32>
    %44 = vector.extract_strided_slice %26 {offsets = [0, 64], sizes = [8, 32], strides = [1, 1]} : vector<8x96xf32> to vector<8x32xf32>
    %45 = vector.extract_strided_slice %27 {offsets = [0, 64], sizes = [8, 32], strides = [1, 1]} : vector<8x96xf32> to vector<8x32xf32>
    %46 = vector.broadcast %21 : vector<1x32xf32> to vector<8x32xf32>
    %47 = arith.addf %45, %46 : vector<8x32xf32>
    %48 = arith.mulf %35, %47 : vector<8x32xf32>
    %49 = arith.addf %44, %48 : vector<8x32xf32>
    %50 = math.tanh %49 : vector<8x32xf32>
    %cst_14 = arith.constant 1.000000e+00 : f32
    %51 = vector.broadcast %cst_14 : f32 to vector<8x32xf32>
    %52 = arith.subf %51, %43 : vector<8x32xf32>
    %53 = arith.mulf %52, %50 : vector<8x32xf32>
    %54 = arith.mulf %43, %25 : vector<8x32xf32>
    %55 = arith.addf %53, %54 : vector<8x32xf32>
    %56 = vector.extract_strided_slice %24 {offsets = [8, 0], sizes = [8, 96], strides = [1, 1]} : vector<64x96xf32> to vector<8x96xf32>
    %cst_15 = arith.constant dense<0.000000e+00> : vector<8x96xf32>
    %57 = tpu.matmul %55, %19, %cst_15 {dimension_numbers = #tpu.dot_dimension_numbers<[1], [0], [0], [1], [0, 0, 1, 1], [], []>} : vector<8x32xf32>, vector<32x96xf32>, vector<8x96xf32> -> vector<8x96xf32>
    %58 = vector.extract_strided_slice %56 {offsets = [0, 0], sizes = [8, 32], strides = [1, 1]} : vector<8x96xf32> to vector<8x32xf32>
    %59 = vector.extract_strided_slice %57 {offsets = [0, 0], sizes = [8, 32], strides = [1, 1]} : vector<8x96xf32> to vector<8x32xf32>
    %60 = arith.addf %58, %59 : vector<8x32xf32>
    %61 = arith.negf %60 : vector<8x32xf32>
    %62 = math.exp %61 : vector<8x32xf32>
    %cst_16 = arith.constant 1.000000e+00 : f32
    %63 = vector.broadcast %cst_16 : f32 to vector<8x32xf32>
    %64 = arith.addf %63, %62 : vector<8x32xf32>
    %65 = arith.divf %63, %64 : vector<8x32xf32>
    %66 = vector.extract_strided_slice %56 {offsets = [0, 32], sizes = [8, 32], strides = [1, 1]} : vector<8x96xf32> to vector<8x32xf32>
    %67 = vector.extract_strided_slice %57 {offsets = [0, 32], sizes = [8, 32], strides = [1, 1]} : vector<8x96xf32> to vector<8x32xf32>
    %68 = arith.addf %66, %67 : vector<8x32xf32>
    %69 = arith.negf %68 : vector<8x32xf32>
    %70 = math.exp %69 : vector<8x32xf32>
    %cst_17 = arith.constant 1.000000e+00 : f32
    %71 = vector.broadcast %cst_17 : f32 to vector<8x32xf32>
    %72 = arith.addf %71, %70 : vector<8x32xf32>
    %73 = arith.divf %71, %72 : vector<8x32xf32>
    %74 = vector.extract_strided_slice %56 {offsets = [0, 64], sizes = [8, 32], strides = [1, 1]} : vector<8x96xf32> to vector<8x32xf32>
    %75 = vector.extract_strided_slice %57 {offsets = [0, 64], sizes = [8, 32], strides = [1, 1]} : vector<8x96xf32> to vector<8x32xf32>
    %76 = vector.broadcast %21 : vector<1x32xf32> to vector<8x32xf32>
    %77 = arith.addf %75, %76 : vector<8x32xf32>
    %78 = arith.mulf %65, %77 : vector<8x32xf32>
    %79 = arith.addf %74, %78 : vector<8x32xf32>
    %80 = math.tanh %79 : vector<8x32xf32>
    %cst_18 = arith.constant 1.000000e+00 : f32
    %81 = vector.broadcast %cst_18 : f32 to vector<8x32xf32>
    %82 = arith.subf %81, %73 : vector<8x32xf32>
    %83 = arith.mulf %82, %80 : vector<8x32xf32>
    %84 = arith.mulf %73, %55 : vector<8x32xf32>
    %85 = arith.addf %83, %84 : vector<8x32xf32>
    %86 = vector.extract_strided_slice %24 {offsets = [16, 0], sizes = [8, 96], strides = [1, 1]} : vector<64x96xf32> to vector<8x96xf32>
    %cst_19 = arith.constant dense<0.000000e+00> : vector<8x96xf32>
    %87 = tpu.matmul %85, %19, %cst_19 {dimension_numbers = #tpu.dot_dimension_numbers<[1], [0], [0], [1], [0, 0, 1, 1], [], []>} : vector<8x32xf32>, vector<32x96xf32>, vector<8x96xf32> -> vector<8x96xf32>
    %88 = vector.extract_strided_slice %86 {offsets = [0, 0], sizes = [8, 32], strides = [1, 1]} : vector<8x96xf32> to vector<8x32xf32>
    %89 = vector.extract_strided_slice %87 {offsets = [0, 0], sizes = [8, 32], strides = [1, 1]} : vector<8x96xf32> to vector<8x32xf32>
    %90 = arith.addf %88, %89 : vector<8x32xf32>
    %91 = arith.negf %90 : vector<8x32xf32>
    %92 = math.exp %91 : vector<8x32xf32>
    %cst_20 = arith.constant 1.000000e+00 : f32
    %93 = vector.broadcast %cst_20 : f32 to vector<8x32xf32>
    %94 = arith.addf %93, %92 : vector<8x32xf32>
    %95 = arith.divf %93, %94 : vector<8x32xf32>
    %96 = vector.extract_strided_slice %86 {offsets = [0, 32], sizes = [8, 32], strides = [1, 1]} : vector<8x96xf32> to vector<8x32xf32>
    %97 = vector.extract_strided_slice %87 {offsets = [0, 32], sizes = [8, 32], strides = [1, 1]} : vector<8x96xf32> to vector<8x32xf32>
    %98 = arith.addf %96, %97 : vector<8x32xf32>
    %99 = arith.negf %98 : vector<8x32xf32>
    %100 = math.exp %99 : vector<8x32xf32>
    %cst_21 = arith.constant 1.000000e+00 : f32
    %101 = vector.broadcast %cst_21 : f32 to vector<8x32xf32>
    %102 = arith.addf %101, %100 : vector<8x32xf32>
    %103 = arith.divf %101, %102 : vector<8x32xf32>
    %104 = vector.extract_strided_slice %86 {offsets = [0, 64], sizes = [8, 32], strides = [1, 1]} : vector<8x96xf32> to vector<8x32xf32>
    %105 = vector.extract_strided_slice %87 {offsets = [0, 64], sizes = [8, 32], strides = [1, 1]} : vector<8x96xf32> to vector<8x32xf32>
    %106 = vector.broadcast %21 : vector<1x32xf32> to vector<8x32xf32>
    %107 = arith.addf %105, %106 : vector<8x32xf32>
    %108 = arith.mulf %95, %107 : vector<8x32xf32>
    %109 = arith.addf %104, %108 : vector<8x32xf32>
    %110 = math.tanh %109 : vector<8x32xf32>
    %cst_22 = arith.constant 1.000000e+00 : f32
    %111 = vector.broadcast %cst_22 : f32 to vector<8x32xf32>
    %112 = arith.subf %111, %103 : vector<8x32xf32>
    %113 = arith.mulf %112, %110 : vector<8x32xf32>
    %114 = arith.mulf %103, %85 : vector<8x32xf32>
    %115 = arith.addf %113, %114 : vector<8x32xf32>
    %116 = vector.extract_strided_slice %24 {offsets = [24, 0], sizes = [8, 96], strides = [1, 1]} : vector<64x96xf32> to vector<8x96xf32>
    %cst_23 = arith.constant dense<0.000000e+00> : vector<8x96xf32>
    %117 = tpu.matmul %115, %19, %cst_23 {dimension_numbers = #tpu.dot_dimension_numbers<[1], [0], [0], [1], [0, 0, 1, 1], [], []>} : vector<8x32xf32>, vector<32x96xf32>, vector<8x96xf32> -> vector<8x96xf32>
    %118 = vector.extract_strided_slice %116 {offsets = [0, 0], sizes = [8, 32], strides = [1, 1]} : vector<8x96xf32> to vector<8x32xf32>
    %119 = vector.extract_strided_slice %117 {offsets = [0, 0], sizes = [8, 32], strides = [1, 1]} : vector<8x96xf32> to vector<8x32xf32>
    %120 = arith.addf %118, %119 : vector<8x32xf32>
    %121 = arith.negf %120 : vector<8x32xf32>
    %122 = math.exp %121 : vector<8x32xf32>
    %cst_24 = arith.constant 1.000000e+00 : f32
    %123 = vector.broadcast %cst_24 : f32 to vector<8x32xf32>
    %124 = arith.addf %123, %122 : vector<8x32xf32>
    %125 = arith.divf %123, %124 : vector<8x32xf32>
    %126 = vector.extract_strided_slice %116 {offsets = [0, 32], sizes = [8, 32], strides = [1, 1]} : vector<8x96xf32> to vector<8x32xf32>
    %127 = vector.extract_strided_slice %117 {offsets = [0, 32], sizes = [8, 32], strides = [1, 1]} : vector<8x96xf32> to vector<8x32xf32>
    %128 = arith.addf %126, %127 : vector<8x32xf32>
    %129 = arith.negf %128 : vector<8x32xf32>
    %130 = math.exp %129 : vector<8x32xf32>
    %cst_25 = arith.constant 1.000000e+00 : f32
    %131 = vector.broadcast %cst_25 : f32 to vector<8x32xf32>
    %132 = arith.addf %131, %130 : vector<8x32xf32>
    %133 = arith.divf %131, %132 : vector<8x32xf32>
    %134 = vector.extract_strided_slice %116 {offsets = [0, 64], sizes = [8, 32], strides = [1, 1]} : vector<8x96xf32> to vector<8x32xf32>
    %135 = vector.extract_strided_slice %117 {offsets = [0, 64], sizes = [8, 32], strides = [1, 1]} : vector<8x96xf32> to vector<8x32xf32>
    %136 = vector.broadcast %21 : vector<1x32xf32> to vector<8x32xf32>
    %137 = arith.addf %135, %136 : vector<8x32xf32>
    %138 = arith.mulf %125, %137 : vector<8x32xf32>
    %139 = arith.addf %134, %138 : vector<8x32xf32>
    %140 = math.tanh %139 : vector<8x32xf32>
    %cst_26 = arith.constant 1.000000e+00 : f32
    %141 = vector.broadcast %cst_26 : f32 to vector<8x32xf32>
    %142 = arith.subf %141, %133 : vector<8x32xf32>
    %143 = arith.mulf %142, %140 : vector<8x32xf32>
    %144 = arith.mulf %133, %115 : vector<8x32xf32>
    %145 = arith.addf %143, %144 : vector<8x32xf32>
    %146 = vector.extract_strided_slice %24 {offsets = [32, 0], sizes = [8, 96], strides = [1, 1]} : vector<64x96xf32> to vector<8x96xf32>
    %cst_27 = arith.constant dense<0.000000e+00> : vector<8x96xf32>
    %147 = tpu.matmul %145, %19, %cst_27 {dimension_numbers = #tpu.dot_dimension_numbers<[1], [0], [0], [1], [0, 0, 1, 1], [], []>} : vector<8x32xf32>, vector<32x96xf32>, vector<8x96xf32> -> vector<8x96xf32>
    %148 = vector.extract_strided_slice %146 {offsets = [0, 0], sizes = [8, 32], strides = [1, 1]} : vector<8x96xf32> to vector<8x32xf32>
    %149 = vector.extract_strided_slice %147 {offsets = [0, 0], sizes = [8, 32], strides = [1, 1]} : vector<8x96xf32> to vector<8x32xf32>
    %150 = arith.addf %148, %149 : vector<8x32xf32>
    %151 = arith.negf %150 : vector<8x32xf32>
    %152 = math.exp %151 : vector<8x32xf32>
    %cst_28 = arith.constant 1.000000e+00 : f32
    %153 = vector.broadcast %cst_28 : f32 to vector<8x32xf32>
    %154 = arith.addf %153, %152 : vector<8x32xf32>
    %155 = arith.divf %153, %154 : vector<8x32xf32>
    %156 = vector.extract_strided_slice %146 {offsets = [0, 32], sizes = [8, 32], strides = [1, 1]} : vector<8x96xf32> to vector<8x32xf32>
    %157 = vector.extract_strided_slice %147 {offsets = [0, 32], sizes = [8, 32], strides = [1, 1]} : vector<8x96xf32> to vector<8x32xf32>
    %158 = arith.addf %156, %157 : vector<8x32xf32>
    %159 = arith.negf %158 : vector<8x32xf32>
    %160 = math.exp %159 : vector<8x32xf32>
    %cst_29 = arith.constant 1.000000e+00 : f32
    %161 = vector.broadcast %cst_29 : f32 to vector<8x32xf32>
    %162 = arith.addf %161, %160 : vector<8x32xf32>
    %163 = arith.divf %161, %162 : vector<8x32xf32>
    %164 = vector.extract_strided_slice %146 {offsets = [0, 64], sizes = [8, 32], strides = [1, 1]} : vector<8x96xf32> to vector<8x32xf32>
    %165 = vector.extract_strided_slice %147 {offsets = [0, 64], sizes = [8, 32], strides = [1, 1]} : vector<8x96xf32> to vector<8x32xf32>
    %166 = vector.broadcast %21 : vector<1x32xf32> to vector<8x32xf32>
    %167 = arith.addf %165, %166 : vector<8x32xf32>
    %168 = arith.mulf %155, %167 : vector<8x32xf32>
    %169 = arith.addf %164, %168 : vector<8x32xf32>
    %170 = math.tanh %169 : vector<8x32xf32>
    %cst_30 = arith.constant 1.000000e+00 : f32
    %171 = vector.broadcast %cst_30 : f32 to vector<8x32xf32>
    %172 = arith.subf %171, %163 : vector<8x32xf32>
    %173 = arith.mulf %172, %170 : vector<8x32xf32>
    %174 = arith.mulf %163, %145 : vector<8x32xf32>
    %175 = arith.addf %173, %174 : vector<8x32xf32>
    %176 = vector.extract_strided_slice %24 {offsets = [40, 0], sizes = [8, 96], strides = [1, 1]} : vector<64x96xf32> to vector<8x96xf32>
    %cst_31 = arith.constant dense<0.000000e+00> : vector<8x96xf32>
    %177 = tpu.matmul %175, %19, %cst_31 {dimension_numbers = #tpu.dot_dimension_numbers<[1], [0], [0], [1], [0, 0, 1, 1], [], []>} : vector<8x32xf32>, vector<32x96xf32>, vector<8x96xf32> -> vector<8x96xf32>
    %178 = vector.extract_strided_slice %176 {offsets = [0, 0], sizes = [8, 32], strides = [1, 1]} : vector<8x96xf32> to vector<8x32xf32>
    %179 = vector.extract_strided_slice %177 {offsets = [0, 0], sizes = [8, 32], strides = [1, 1]} : vector<8x96xf32> to vector<8x32xf32>
    %180 = arith.addf %178, %179 : vector<8x32xf32>
    %181 = arith.negf %180 : vector<8x32xf32>
    %182 = math.exp %181 : vector<8x32xf32>
    %cst_32 = arith.constant 1.000000e+00 : f32
    %183 = vector.broadcast %cst_32 : f32 to vector<8x32xf32>
    %184 = arith.addf %183, %182 : vector<8x32xf32>
    %185 = arith.divf %183, %184 : vector<8x32xf32>
    %186 = vector.extract_strided_slice %176 {offsets = [0, 32], sizes = [8, 32], strides = [1, 1]} : vector<8x96xf32> to vector<8x32xf32>
    %187 = vector.extract_strided_slice %177 {offsets = [0, 32], sizes = [8, 32], strides = [1, 1]} : vector<8x96xf32> to vector<8x32xf32>
    %188 = arith.addf %186, %187 : vector<8x32xf32>
    %189 = arith.negf %188 : vector<8x32xf32>
    %190 = math.exp %189 : vector<8x32xf32>
    %cst_33 = arith.constant 1.000000e+00 : f32
    %191 = vector.broadcast %cst_33 : f32 to vector<8x32xf32>
    %192 = arith.addf %191, %190 : vector<8x32xf32>
    %193 = arith.divf %191, %192 : vector<8x32xf32>
    %194 = vector.extract_strided_slice %176 {offsets = [0, 64], sizes = [8, 32], strides = [1, 1]} : vector<8x96xf32> to vector<8x32xf32>
    %195 = vector.extract_strided_slice %177 {offsets = [0, 64], sizes = [8, 32], strides = [1, 1]} : vector<8x96xf32> to vector<8x32xf32>
    %196 = vector.broadcast %21 : vector<1x32xf32> to vector<8x32xf32>
    %197 = arith.addf %195, %196 : vector<8x32xf32>
    %198 = arith.mulf %185, %197 : vector<8x32xf32>
    %199 = arith.addf %194, %198 : vector<8x32xf32>
    %200 = math.tanh %199 : vector<8x32xf32>
    %cst_34 = arith.constant 1.000000e+00 : f32
    %201 = vector.broadcast %cst_34 : f32 to vector<8x32xf32>
    %202 = arith.subf %201, %193 : vector<8x32xf32>
    %203 = arith.mulf %202, %200 : vector<8x32xf32>
    %204 = arith.mulf %193, %175 : vector<8x32xf32>
    %205 = arith.addf %203, %204 : vector<8x32xf32>
    %206 = vector.extract_strided_slice %24 {offsets = [48, 0], sizes = [8, 96], strides = [1, 1]} : vector<64x96xf32> to vector<8x96xf32>
    %cst_35 = arith.constant dense<0.000000e+00> : vector<8x96xf32>
    %207 = tpu.matmul %205, %19, %cst_35 {dimension_numbers = #tpu.dot_dimension_numbers<[1], [0], [0], [1], [0, 0, 1, 1], [], []>} : vector<8x32xf32>, vector<32x96xf32>, vector<8x96xf32> -> vector<8x96xf32>
    %208 = vector.extract_strided_slice %206 {offsets = [0, 0], sizes = [8, 32], strides = [1, 1]} : vector<8x96xf32> to vector<8x32xf32>
    %209 = vector.extract_strided_slice %207 {offsets = [0, 0], sizes = [8, 32], strides = [1, 1]} : vector<8x96xf32> to vector<8x32xf32>
    %210 = arith.addf %208, %209 : vector<8x32xf32>
    %211 = arith.negf %210 : vector<8x32xf32>
    %212 = math.exp %211 : vector<8x32xf32>
    %cst_36 = arith.constant 1.000000e+00 : f32
    %213 = vector.broadcast %cst_36 : f32 to vector<8x32xf32>
    %214 = arith.addf %213, %212 : vector<8x32xf32>
    %215 = arith.divf %213, %214 : vector<8x32xf32>
    %216 = vector.extract_strided_slice %206 {offsets = [0, 32], sizes = [8, 32], strides = [1, 1]} : vector<8x96xf32> to vector<8x32xf32>
    %217 = vector.extract_strided_slice %207 {offsets = [0, 32], sizes = [8, 32], strides = [1, 1]} : vector<8x96xf32> to vector<8x32xf32>
    %218 = arith.addf %216, %217 : vector<8x32xf32>
    %219 = arith.negf %218 : vector<8x32xf32>
    %220 = math.exp %219 : vector<8x32xf32>
    %cst_37 = arith.constant 1.000000e+00 : f32
    %221 = vector.broadcast %cst_37 : f32 to vector<8x32xf32>
    %222 = arith.addf %221, %220 : vector<8x32xf32>
    %223 = arith.divf %221, %222 : vector<8x32xf32>
    %224 = vector.extract_strided_slice %206 {offsets = [0, 64], sizes = [8, 32], strides = [1, 1]} : vector<8x96xf32> to vector<8x32xf32>
    %225 = vector.extract_strided_slice %207 {offsets = [0, 64], sizes = [8, 32], strides = [1, 1]} : vector<8x96xf32> to vector<8x32xf32>
    %226 = vector.broadcast %21 : vector<1x32xf32> to vector<8x32xf32>
    %227 = arith.addf %225, %226 : vector<8x32xf32>
    %228 = arith.mulf %215, %227 : vector<8x32xf32>
    %229 = arith.addf %224, %228 : vector<8x32xf32>
    %230 = math.tanh %229 : vector<8x32xf32>
    %cst_38 = arith.constant 1.000000e+00 : f32
    %231 = vector.broadcast %cst_38 : f32 to vector<8x32xf32>
    %232 = arith.subf %231, %223 : vector<8x32xf32>
    %233 = arith.mulf %232, %230 : vector<8x32xf32>
    %234 = arith.mulf %223, %205 : vector<8x32xf32>
    %235 = arith.addf %233, %234 : vector<8x32xf32>
    %236 = vector.extract_strided_slice %24 {offsets = [56, 0], sizes = [8, 96], strides = [1, 1]} : vector<64x96xf32> to vector<8x96xf32>
    %cst_39 = arith.constant dense<0.000000e+00> : vector<8x96xf32>
    %237 = tpu.matmul %235, %19, %cst_39 {dimension_numbers = #tpu.dot_dimension_numbers<[1], [0], [0], [1], [0, 0, 1, 1], [], []>} : vector<8x32xf32>, vector<32x96xf32>, vector<8x96xf32> -> vector<8x96xf32>
    %238 = vector.extract_strided_slice %236 {offsets = [0, 0], sizes = [8, 32], strides = [1, 1]} : vector<8x96xf32> to vector<8x32xf32>
    %239 = vector.extract_strided_slice %237 {offsets = [0, 0], sizes = [8, 32], strides = [1, 1]} : vector<8x96xf32> to vector<8x32xf32>
    %240 = arith.addf %238, %239 : vector<8x32xf32>
    %241 = arith.negf %240 : vector<8x32xf32>
    %242 = math.exp %241 : vector<8x32xf32>
    %cst_40 = arith.constant 1.000000e+00 : f32
    %243 = vector.broadcast %cst_40 : f32 to vector<8x32xf32>
    %244 = arith.addf %243, %242 : vector<8x32xf32>
    %245 = arith.divf %243, %244 : vector<8x32xf32>
    %246 = vector.extract_strided_slice %236 {offsets = [0, 32], sizes = [8, 32], strides = [1, 1]} : vector<8x96xf32> to vector<8x32xf32>
    %247 = vector.extract_strided_slice %237 {offsets = [0, 32], sizes = [8, 32], strides = [1, 1]} : vector<8x96xf32> to vector<8x32xf32>
    %248 = arith.addf %246, %247 : vector<8x32xf32>
    %249 = arith.negf %248 : vector<8x32xf32>
    %250 = math.exp %249 : vector<8x32xf32>
    %cst_41 = arith.constant 1.000000e+00 : f32
    %251 = vector.broadcast %cst_41 : f32 to vector<8x32xf32>
    %252 = arith.addf %251, %250 : vector<8x32xf32>
    %253 = arith.divf %251, %252 : vector<8x32xf32>
    %254 = vector.extract_strided_slice %236 {offsets = [0, 64], sizes = [8, 32], strides = [1, 1]} : vector<8x96xf32> to vector<8x32xf32>
    %255 = vector.extract_strided_slice %237 {offsets = [0, 64], sizes = [8, 32], strides = [1, 1]} : vector<8x96xf32> to vector<8x32xf32>
    %256 = vector.broadcast %21 : vector<1x32xf32> to vector<8x32xf32>
    %257 = arith.addf %255, %256 : vector<8x32xf32>
    %258 = arith.mulf %245, %257 : vector<8x32xf32>
    %259 = arith.addf %254, %258 : vector<8x32xf32>
    %260 = math.tanh %259 : vector<8x32xf32>
    %cst_42 = arith.constant 1.000000e+00 : f32
    %261 = vector.broadcast %cst_42 : f32 to vector<8x32xf32>
    %262 = arith.subf %261, %253 : vector<8x32xf32>
    %263 = arith.mulf %262, %260 : vector<8x32xf32>
    %264 = arith.mulf %253, %235 : vector<8x32xf32>
    %265 = arith.addf %263, %264 : vector<8x32xf32>
    %266 = tpu.concatenate %55, %85, %115, %145, %175, %205, %235, %265 in 0 : vector<8x32xf32>, vector<8x32xf32>, vector<8x32xf32>, vector<8x32xf32>, vector<8x32xf32>, vector<8x32xf32>, vector<8x32xf32>, vector<8x32xf32> -> vector<64x32xf32>
    %c0_43 = arith.constant 0 : index
    %c0_44 = arith.constant 0 : index
    %267 = vector.load %arg5[%c0_43, %c0_44] : memref<32x96xf32, #tpu.memory_space<vmem>>, vector<32x96xf32>
    %c0_45 = arith.constant 0 : index
    %c0_46 = arith.constant 0 : index
    %268 = vector.load %arg6[%c0_45, %c0_46] : memref<32x96xf32, #tpu.memory_space<vmem>>, vector<32x96xf32>
    %c0_47 = arith.constant 0 : index
    %c0_48 = arith.constant 0 : index
    %269 = vector.load %arg7[%c0_47, %c0_48] : memref<1x96xf32, #tpu.memory_space<vmem>>, vector<1x96xf32>
    %c0_49 = arith.constant 0 : index
    %c0_50 = arith.constant 0 : index
    %270 = vector.load %arg8[%c0_49, %c0_50] : memref<1x32xf32, #tpu.memory_space<vmem>>, vector<1x32xf32>
    %cst_51 = arith.constant dense<0.000000e+00> : vector<64x96xf32>
    %271 = tpu.matmul %266, %267, %cst_51 {dimension_numbers = #tpu.dot_dimension_numbers<[1], [0], [0], [1], [0, 0, 1, 1], [], []>} : vector<64x32xf32>, vector<32x96xf32>, vector<64x96xf32> -> vector<64x96xf32>
    %272 = vector.broadcast %269 : vector<1x96xf32> to vector<64x96xf32>
    %273 = arith.addf %271, %272 : vector<64x96xf32>
    %cst_52 = arith.constant 0.000000e+00 : f32
    %274 = vector.broadcast %cst_52 : f32 to vector<8x32xf32>
    %275 = vector.extract_strided_slice %273 {offsets = [0, 0], sizes = [8, 96], strides = [1, 1]} : vector<64x96xf32> to vector<8x96xf32>
    %cst_53 = arith.constant dense<0.000000e+00> : vector<8x96xf32>
    %276 = tpu.matmul %274, %268, %cst_53 {dimension_numbers = #tpu.dot_dimension_numbers<[1], [0], [0], [1], [0, 0, 1, 1], [], []>} : vector<8x32xf32>, vector<32x96xf32>, vector<8x96xf32> -> vector<8x96xf32>
    %277 = vector.extract_strided_slice %275 {offsets = [0, 0], sizes = [8, 32], strides = [1, 1]} : vector<8x96xf32> to vector<8x32xf32>
    %278 = vector.extract_strided_slice %276 {offsets = [0, 0], sizes = [8, 32], strides = [1, 1]} : vector<8x96xf32> to vector<8x32xf32>
    %279 = arith.addf %277, %278 : vector<8x32xf32>
    %280 = arith.negf %279 : vector<8x32xf32>
    %281 = math.exp %280 : vector<8x32xf32>
    %cst_54 = arith.constant 1.000000e+00 : f32
    %282 = vector.broadcast %cst_54 : f32 to vector<8x32xf32>
    %283 = arith.addf %282, %281 : vector<8x32xf32>
    %284 = arith.divf %282, %283 : vector<8x32xf32>
    %285 = vector.extract_strided_slice %275 {offsets = [0, 32], sizes = [8, 32], strides = [1, 1]} : vector<8x96xf32> to vector<8x32xf32>
    %286 = vector.extract_strided_slice %276 {offsets = [0, 32], sizes = [8, 32], strides = [1, 1]} : vector<8x96xf32> to vector<8x32xf32>
    %287 = arith.addf %285, %286 : vector<8x32xf32>
    %288 = arith.negf %287 : vector<8x32xf32>
    %289 = math.exp %288 : vector<8x32xf32>
    %cst_55 = arith.constant 1.000000e+00 : f32
    %290 = vector.broadcast %cst_55 : f32 to vector<8x32xf32>
    %291 = arith.addf %290, %289 : vector<8x32xf32>
    %292 = arith.divf %290, %291 : vector<8x32xf32>
    %293 = vector.extract_strided_slice %275 {offsets = [0, 64], sizes = [8, 32], strides = [1, 1]} : vector<8x96xf32> to vector<8x32xf32>
    %294 = vector.extract_strided_slice %276 {offsets = [0, 64], sizes = [8, 32], strides = [1, 1]} : vector<8x96xf32> to vector<8x32xf32>
    %295 = vector.broadcast %270 : vector<1x32xf32> to vector<8x32xf32>
    %296 = arith.addf %294, %295 : vector<8x32xf32>
    %297 = arith.mulf %284, %296 : vector<8x32xf32>
    %298 = arith.addf %293, %297 : vector<8x32xf32>
    %299 = math.tanh %298 : vector<8x32xf32>
    %cst_56 = arith.constant 1.000000e+00 : f32
    %300 = vector.broadcast %cst_56 : f32 to vector<8x32xf32>
    %301 = arith.subf %300, %292 : vector<8x32xf32>
    %302 = arith.mulf %301, %299 : vector<8x32xf32>
    %303 = arith.mulf %292, %274 : vector<8x32xf32>
    %304 = arith.addf %302, %303 : vector<8x32xf32>
    %305 = vector.extract_strided_slice %273 {offsets = [8, 0], sizes = [8, 96], strides = [1, 1]} : vector<64x96xf32> to vector<8x96xf32>
    %cst_57 = arith.constant dense<0.000000e+00> : vector<8x96xf32>
    %306 = tpu.matmul %304, %268, %cst_57 {dimension_numbers = #tpu.dot_dimension_numbers<[1], [0], [0], [1], [0, 0, 1, 1], [], []>} : vector<8x32xf32>, vector<32x96xf32>, vector<8x96xf32> -> vector<8x96xf32>
    %307 = vector.extract_strided_slice %305 {offsets = [0, 0], sizes = [8, 32], strides = [1, 1]} : vector<8x96xf32> to vector<8x32xf32>
    %308 = vector.extract_strided_slice %306 {offsets = [0, 0], sizes = [8, 32], strides = [1, 1]} : vector<8x96xf32> to vector<8x32xf32>
    %309 = arith.addf %307, %308 : vector<8x32xf32>
    %310 = arith.negf %309 : vector<8x32xf32>
    %311 = math.exp %310 : vector<8x32xf32>
    %cst_58 = arith.constant 1.000000e+00 : f32
    %312 = vector.broadcast %cst_58 : f32 to vector<8x32xf32>
    %313 = arith.addf %312, %311 : vector<8x32xf32>
    %314 = arith.divf %312, %313 : vector<8x32xf32>
    %315 = vector.extract_strided_slice %305 {offsets = [0, 32], sizes = [8, 32], strides = [1, 1]} : vector<8x96xf32> to vector<8x32xf32>
    %316 = vector.extract_strided_slice %306 {offsets = [0, 32], sizes = [8, 32], strides = [1, 1]} : vector<8x96xf32> to vector<8x32xf32>
    %317 = arith.addf %315, %316 : vector<8x32xf32>
    %318 = arith.negf %317 : vector<8x32xf32>
    %319 = math.exp %318 : vector<8x32xf32>
    %cst_59 = arith.constant 1.000000e+00 : f32
    %320 = vector.broadcast %cst_59 : f32 to vector<8x32xf32>
    %321 = arith.addf %320, %319 : vector<8x32xf32>
    %322 = arith.divf %320, %321 : vector<8x32xf32>
    %323 = vector.extract_strided_slice %305 {offsets = [0, 64], sizes = [8, 32], strides = [1, 1]} : vector<8x96xf32> to vector<8x32xf32>
    %324 = vector.extract_strided_slice %306 {offsets = [0, 64], sizes = [8, 32], strides = [1, 1]} : vector<8x96xf32> to vector<8x32xf32>
    %325 = vector.broadcast %270 : vector<1x32xf32> to vector<8x32xf32>
    %326 = arith.addf %324, %325 : vector<8x32xf32>
    %327 = arith.mulf %314, %326 : vector<8x32xf32>
    %328 = arith.addf %323, %327 : vector<8x32xf32>
    %329 = math.tanh %328 : vector<8x32xf32>
    %cst_60 = arith.constant 1.000000e+00 : f32
    %330 = vector.broadcast %cst_60 : f32 to vector<8x32xf32>
    %331 = arith.subf %330, %322 : vector<8x32xf32>
    %332 = arith.mulf %331, %329 : vector<8x32xf32>
    %333 = arith.mulf %322, %304 : vector<8x32xf32>
    %334 = arith.addf %332, %333 : vector<8x32xf32>
    %335 = vector.extract_strided_slice %273 {offsets = [16, 0], sizes = [8, 96], strides = [1, 1]} : vector<64x96xf32> to vector<8x96xf32>
    %cst_61 = arith.constant dense<0.000000e+00> : vector<8x96xf32>
    %336 = tpu.matmul %334, %268, %cst_61 {dimension_numbers = #tpu.dot_dimension_numbers<[1], [0], [0], [1], [0, 0, 1, 1], [], []>} : vector<8x32xf32>, vector<32x96xf32>, vector<8x96xf32> -> vector<8x96xf32>
    %337 = vector.extract_strided_slice %335 {offsets = [0, 0], sizes = [8, 32], strides = [1, 1]} : vector<8x96xf32> to vector<8x32xf32>
    %338 = vector.extract_strided_slice %336 {offsets = [0, 0], sizes = [8, 32], strides = [1, 1]} : vector<8x96xf32> to vector<8x32xf32>
    %339 = arith.addf %337, %338 : vector<8x32xf32>
    %340 = arith.negf %339 : vector<8x32xf32>
    %341 = math.exp %340 : vector<8x32xf32>
    %cst_62 = arith.constant 1.000000e+00 : f32
    %342 = vector.broadcast %cst_62 : f32 to vector<8x32xf32>
    %343 = arith.addf %342, %341 : vector<8x32xf32>
    %344 = arith.divf %342, %343 : vector<8x32xf32>
    %345 = vector.extract_strided_slice %335 {offsets = [0, 32], sizes = [8, 32], strides = [1, 1]} : vector<8x96xf32> to vector<8x32xf32>
    %346 = vector.extract_strided_slice %336 {offsets = [0, 32], sizes = [8, 32], strides = [1, 1]} : vector<8x96xf32> to vector<8x32xf32>
    %347 = arith.addf %345, %346 : vector<8x32xf32>
    %348 = arith.negf %347 : vector<8x32xf32>
    %349 = math.exp %348 : vector<8x32xf32>
    %cst_63 = arith.constant 1.000000e+00 : f32
    %350 = vector.broadcast %cst_63 : f32 to vector<8x32xf32>
    %351 = arith.addf %350, %349 : vector<8x32xf32>
    %352 = arith.divf %350, %351 : vector<8x32xf32>
    %353 = vector.extract_strided_slice %335 {offsets = [0, 64], sizes = [8, 32], strides = [1, 1]} : vector<8x96xf32> to vector<8x32xf32>
    %354 = vector.extract_strided_slice %336 {offsets = [0, 64], sizes = [8, 32], strides = [1, 1]} : vector<8x96xf32> to vector<8x32xf32>
    %355 = vector.broadcast %270 : vector<1x32xf32> to vector<8x32xf32>
    %356 = arith.addf %354, %355 : vector<8x32xf32>
    %357 = arith.mulf %344, %356 : vector<8x32xf32>
    %358 = arith.addf %353, %357 : vector<8x32xf32>
    %359 = math.tanh %358 : vector<8x32xf32>
    %cst_64 = arith.constant 1.000000e+00 : f32
    %360 = vector.broadcast %cst_64 : f32 to vector<8x32xf32>
    %361 = arith.subf %360, %352 : vector<8x32xf32>
    %362 = arith.mulf %361, %359 : vector<8x32xf32>
    %363 = arith.mulf %352, %334 : vector<8x32xf32>
    %364 = arith.addf %362, %363 : vector<8x32xf32>
    %365 = vector.extract_strided_slice %273 {offsets = [24, 0], sizes = [8, 96], strides = [1, 1]} : vector<64x96xf32> to vector<8x96xf32>
    %cst_65 = arith.constant dense<0.000000e+00> : vector<8x96xf32>
    %366 = tpu.matmul %364, %268, %cst_65 {dimension_numbers = #tpu.dot_dimension_numbers<[1], [0], [0], [1], [0, 0, 1, 1], [], []>} : vector<8x32xf32>, vector<32x96xf32>, vector<8x96xf32> -> vector<8x96xf32>
    %367 = vector.extract_strided_slice %365 {offsets = [0, 0], sizes = [8, 32], strides = [1, 1]} : vector<8x96xf32> to vector<8x32xf32>
    %368 = vector.extract_strided_slice %366 {offsets = [0, 0], sizes = [8, 32], strides = [1, 1]} : vector<8x96xf32> to vector<8x32xf32>
    %369 = arith.addf %367, %368 : vector<8x32xf32>
    %370 = arith.negf %369 : vector<8x32xf32>
    %371 = math.exp %370 : vector<8x32xf32>
    %cst_66 = arith.constant 1.000000e+00 : f32
    %372 = vector.broadcast %cst_66 : f32 to vector<8x32xf32>
    %373 = arith.addf %372, %371 : vector<8x32xf32>
    %374 = arith.divf %372, %373 : vector<8x32xf32>
    %375 = vector.extract_strided_slice %365 {offsets = [0, 32], sizes = [8, 32], strides = [1, 1]} : vector<8x96xf32> to vector<8x32xf32>
    %376 = vector.extract_strided_slice %366 {offsets = [0, 32], sizes = [8, 32], strides = [1, 1]} : vector<8x96xf32> to vector<8x32xf32>
    %377 = arith.addf %375, %376 : vector<8x32xf32>
    %378 = arith.negf %377 : vector<8x32xf32>
    %379 = math.exp %378 : vector<8x32xf32>
    %cst_67 = arith.constant 1.000000e+00 : f32
    %380 = vector.broadcast %cst_67 : f32 to vector<8x32xf32>
    %381 = arith.addf %380, %379 : vector<8x32xf32>
    %382 = arith.divf %380, %381 : vector<8x32xf32>
    %383 = vector.extract_strided_slice %365 {offsets = [0, 64], sizes = [8, 32], strides = [1, 1]} : vector<8x96xf32> to vector<8x32xf32>
    %384 = vector.extract_strided_slice %366 {offsets = [0, 64], sizes = [8, 32], strides = [1, 1]} : vector<8x96xf32> to vector<8x32xf32>
    %385 = vector.broadcast %270 : vector<1x32xf32> to vector<8x32xf32>
    %386 = arith.addf %384, %385 : vector<8x32xf32>
    %387 = arith.mulf %374, %386 : vector<8x32xf32>
    %388 = arith.addf %383, %387 : vector<8x32xf32>
    %389 = math.tanh %388 : vector<8x32xf32>
    %cst_68 = arith.constant 1.000000e+00 : f32
    %390 = vector.broadcast %cst_68 : f32 to vector<8x32xf32>
    %391 = arith.subf %390, %382 : vector<8x32xf32>
    %392 = arith.mulf %391, %389 : vector<8x32xf32>
    %393 = arith.mulf %382, %364 : vector<8x32xf32>
    %394 = arith.addf %392, %393 : vector<8x32xf32>
    %395 = vector.extract_strided_slice %273 {offsets = [32, 0], sizes = [8, 96], strides = [1, 1]} : vector<64x96xf32> to vector<8x96xf32>
    %cst_69 = arith.constant dense<0.000000e+00> : vector<8x96xf32>
    %396 = tpu.matmul %394, %268, %cst_69 {dimension_numbers = #tpu.dot_dimension_numbers<[1], [0], [0], [1], [0, 0, 1, 1], [], []>} : vector<8x32xf32>, vector<32x96xf32>, vector<8x96xf32> -> vector<8x96xf32>
    %397 = vector.extract_strided_slice %395 {offsets = [0, 0], sizes = [8, 32], strides = [1, 1]} : vector<8x96xf32> to vector<8x32xf32>
    %398 = vector.extract_strided_slice %396 {offsets = [0, 0], sizes = [8, 32], strides = [1, 1]} : vector<8x96xf32> to vector<8x32xf32>
    %399 = arith.addf %397, %398 : vector<8x32xf32>
    %400 = arith.negf %399 : vector<8x32xf32>
    %401 = math.exp %400 : vector<8x32xf32>
    %cst_70 = arith.constant 1.000000e+00 : f32
    %402 = vector.broadcast %cst_70 : f32 to vector<8x32xf32>
    %403 = arith.addf %402, %401 : vector<8x32xf32>
    %404 = arith.divf %402, %403 : vector<8x32xf32>
    %405 = vector.extract_strided_slice %395 {offsets = [0, 32], sizes = [8, 32], strides = [1, 1]} : vector<8x96xf32> to vector<8x32xf32>
    %406 = vector.extract_strided_slice %396 {offsets = [0, 32], sizes = [8, 32], strides = [1, 1]} : vector<8x96xf32> to vector<8x32xf32>
    %407 = arith.addf %405, %406 : vector<8x32xf32>
    %408 = arith.negf %407 : vector<8x32xf32>
    %409 = math.exp %408 : vector<8x32xf32>
    %cst_71 = arith.constant 1.000000e+00 : f32
    %410 = vector.broadcast %cst_71 : f32 to vector<8x32xf32>
    %411 = arith.addf %410, %409 : vector<8x32xf32>
    %412 = arith.divf %410, %411 : vector<8x32xf32>
    %413 = vector.extract_strided_slice %395 {offsets = [0, 64], sizes = [8, 32], strides = [1, 1]} : vector<8x96xf32> to vector<8x32xf32>
    %414 = vector.extract_strided_slice %396 {offsets = [0, 64], sizes = [8, 32], strides = [1, 1]} : vector<8x96xf32> to vector<8x32xf32>
    %415 = vector.broadcast %270 : vector<1x32xf32> to vector<8x32xf32>
    %416 = arith.addf %414, %415 : vector<8x32xf32>
    %417 = arith.mulf %404, %416 : vector<8x32xf32>
    %418 = arith.addf %413, %417 : vector<8x32xf32>
    %419 = math.tanh %418 : vector<8x32xf32>
    %cst_72 = arith.constant 1.000000e+00 : f32
    %420 = vector.broadcast %cst_72 : f32 to vector<8x32xf32>
    %421 = arith.subf %420, %412 : vector<8x32xf32>
    %422 = arith.mulf %421, %419 : vector<8x32xf32>
    %423 = arith.mulf %412, %394 : vector<8x32xf32>
    %424 = arith.addf %422, %423 : vector<8x32xf32>
    %425 = vector.extract_strided_slice %273 {offsets = [40, 0], sizes = [8, 96], strides = [1, 1]} : vector<64x96xf32> to vector<8x96xf32>
    %cst_73 = arith.constant dense<0.000000e+00> : vector<8x96xf32>
    %426 = tpu.matmul %424, %268, %cst_73 {dimension_numbers = #tpu.dot_dimension_numbers<[1], [0], [0], [1], [0, 0, 1, 1], [], []>} : vector<8x32xf32>, vector<32x96xf32>, vector<8x96xf32> -> vector<8x96xf32>
    %427 = vector.extract_strided_slice %425 {offsets = [0, 0], sizes = [8, 32], strides = [1, 1]} : vector<8x96xf32> to vector<8x32xf32>
    %428 = vector.extract_strided_slice %426 {offsets = [0, 0], sizes = [8, 32], strides = [1, 1]} : vector<8x96xf32> to vector<8x32xf32>
    %429 = arith.addf %427, %428 : vector<8x32xf32>
    %430 = arith.negf %429 : vector<8x32xf32>
    %431 = math.exp %430 : vector<8x32xf32>
    %cst_74 = arith.constant 1.000000e+00 : f32
    %432 = vector.broadcast %cst_74 : f32 to vector<8x32xf32>
    %433 = arith.addf %432, %431 : vector<8x32xf32>
    %434 = arith.divf %432, %433 : vector<8x32xf32>
    %435 = vector.extract_strided_slice %425 {offsets = [0, 32], sizes = [8, 32], strides = [1, 1]} : vector<8x96xf32> to vector<8x32xf32>
    %436 = vector.extract_strided_slice %426 {offsets = [0, 32], sizes = [8, 32], strides = [1, 1]} : vector<8x96xf32> to vector<8x32xf32>
    %437 = arith.addf %435, %436 : vector<8x32xf32>
    %438 = arith.negf %437 : vector<8x32xf32>
    %439 = math.exp %438 : vector<8x32xf32>
    %cst_75 = arith.constant 1.000000e+00 : f32
    %440 = vector.broadcast %cst_75 : f32 to vector<8x32xf32>
    %441 = arith.addf %440, %439 : vector<8x32xf32>
    %442 = arith.divf %440, %441 : vector<8x32xf32>
    %443 = vector.extract_strided_slice %425 {offsets = [0, 64], sizes = [8, 32], strides = [1, 1]} : vector<8x96xf32> to vector<8x32xf32>
    %444 = vector.extract_strided_slice %426 {offsets = [0, 64], sizes = [8, 32], strides = [1, 1]} : vector<8x96xf32> to vector<8x32xf32>
    %445 = vector.broadcast %270 : vector<1x32xf32> to vector<8x32xf32>
    %446 = arith.addf %444, %445 : vector<8x32xf32>
    %447 = arith.mulf %434, %446 : vector<8x32xf32>
    %448 = arith.addf %443, %447 : vector<8x32xf32>
    %449 = math.tanh %448 : vector<8x32xf32>
    %cst_76 = arith.constant 1.000000e+00 : f32
    %450 = vector.broadcast %cst_76 : f32 to vector<8x32xf32>
    %451 = arith.subf %450, %442 : vector<8x32xf32>
    %452 = arith.mulf %451, %449 : vector<8x32xf32>
    %453 = arith.mulf %442, %424 : vector<8x32xf32>
    %454 = arith.addf %452, %453 : vector<8x32xf32>
    %455 = vector.extract_strided_slice %273 {offsets = [48, 0], sizes = [8, 96], strides = [1, 1]} : vector<64x96xf32> to vector<8x96xf32>
    %cst_77 = arith.constant dense<0.000000e+00> : vector<8x96xf32>
    %456 = tpu.matmul %454, %268, %cst_77 {dimension_numbers = #tpu.dot_dimension_numbers<[1], [0], [0], [1], [0, 0, 1, 1], [], []>} : vector<8x32xf32>, vector<32x96xf32>, vector<8x96xf32> -> vector<8x96xf32>
    %457 = vector.extract_strided_slice %455 {offsets = [0, 0], sizes = [8, 32], strides = [1, 1]} : vector<8x96xf32> to vector<8x32xf32>
    %458 = vector.extract_strided_slice %456 {offsets = [0, 0], sizes = [8, 32], strides = [1, 1]} : vector<8x96xf32> to vector<8x32xf32>
    %459 = arith.addf %457, %458 : vector<8x32xf32>
    %460 = arith.negf %459 : vector<8x32xf32>
    %461 = math.exp %460 : vector<8x32xf32>
    %cst_78 = arith.constant 1.000000e+00 : f32
    %462 = vector.broadcast %cst_78 : f32 to vector<8x32xf32>
    %463 = arith.addf %462, %461 : vector<8x32xf32>
    %464 = arith.divf %462, %463 : vector<8x32xf32>
    %465 = vector.extract_strided_slice %455 {offsets = [0, 32], sizes = [8, 32], strides = [1, 1]} : vector<8x96xf32> to vector<8x32xf32>
    %466 = vector.extract_strided_slice %456 {offsets = [0, 32], sizes = [8, 32], strides = [1, 1]} : vector<8x96xf32> to vector<8x32xf32>
    %467 = arith.addf %465, %466 : vector<8x32xf32>
    %468 = arith.negf %467 : vector<8x32xf32>
    %469 = math.exp %468 : vector<8x32xf32>
    %cst_79 = arith.constant 1.000000e+00 : f32
    %470 = vector.broadcast %cst_79 : f32 to vector<8x32xf32>
    %471 = arith.addf %470, %469 : vector<8x32xf32>
    %472 = arith.divf %470, %471 : vector<8x32xf32>
    %473 = vector.extract_strided_slice %455 {offsets = [0, 64], sizes = [8, 32], strides = [1, 1]} : vector<8x96xf32> to vector<8x32xf32>
    %474 = vector.extract_strided_slice %456 {offsets = [0, 64], sizes = [8, 32], strides = [1, 1]} : vector<8x96xf32> to vector<8x32xf32>
    %475 = vector.broadcast %270 : vector<1x32xf32> to vector<8x32xf32>
    %476 = arith.addf %474, %475 : vector<8x32xf32>
    %477 = arith.mulf %464, %476 : vector<8x32xf32>
    %478 = arith.addf %473, %477 : vector<8x32xf32>
    %479 = math.tanh %478 : vector<8x32xf32>
    %cst_80 = arith.constant 1.000000e+00 : f32
    %480 = vector.broadcast %cst_80 : f32 to vector<8x32xf32>
    %481 = arith.subf %480, %472 : vector<8x32xf32>
    %482 = arith.mulf %481, %479 : vector<8x32xf32>
    %483 = arith.mulf %472, %454 : vector<8x32xf32>
    %484 = arith.addf %482, %483 : vector<8x32xf32>
    %485 = vector.extract_strided_slice %273 {offsets = [56, 0], sizes = [8, 96], strides = [1, 1]} : vector<64x96xf32> to vector<8x96xf32>
    %cst_81 = arith.constant dense<0.000000e+00> : vector<8x96xf32>
    %486 = tpu.matmul %484, %268, %cst_81 {dimension_numbers = #tpu.dot_dimension_numbers<[1], [0], [0], [1], [0, 0, 1, 1], [], []>} : vector<8x32xf32>, vector<32x96xf32>, vector<8x96xf32> -> vector<8x96xf32>
    %487 = vector.extract_strided_slice %485 {offsets = [0, 0], sizes = [8, 32], strides = [1, 1]} : vector<8x96xf32> to vector<8x32xf32>
    %488 = vector.extract_strided_slice %486 {offsets = [0, 0], sizes = [8, 32], strides = [1, 1]} : vector<8x96xf32> to vector<8x32xf32>
    %489 = arith.addf %487, %488 : vector<8x32xf32>
    %490 = arith.negf %489 : vector<8x32xf32>
    %491 = math.exp %490 : vector<8x32xf32>
    %cst_82 = arith.constant 1.000000e+00 : f32
    %492 = vector.broadcast %cst_82 : f32 to vector<8x32xf32>
    %493 = arith.addf %492, %491 : vector<8x32xf32>
    %494 = arith.divf %492, %493 : vector<8x32xf32>
    %495 = vector.extract_strided_slice %485 {offsets = [0, 32], sizes = [8, 32], strides = [1, 1]} : vector<8x96xf32> to vector<8x32xf32>
    %496 = vector.extract_strided_slice %486 {offsets = [0, 32], sizes = [8, 32], strides = [1, 1]} : vector<8x96xf32> to vector<8x32xf32>
    %497 = arith.addf %495, %496 : vector<8x32xf32>
    %498 = arith.negf %497 : vector<8x32xf32>
    %499 = math.exp %498 : vector<8x32xf32>
    %cst_83 = arith.constant 1.000000e+00 : f32
    %500 = vector.broadcast %cst_83 : f32 to vector<8x32xf32>
    %501 = arith.addf %500, %499 : vector<8x32xf32>
    %502 = arith.divf %500, %501 : vector<8x32xf32>
    %503 = vector.extract_strided_slice %485 {offsets = [0, 64], sizes = [8, 32], strides = [1, 1]} : vector<8x96xf32> to vector<8x32xf32>
    %504 = vector.extract_strided_slice %486 {offsets = [0, 64], sizes = [8, 32], strides = [1, 1]} : vector<8x96xf32> to vector<8x32xf32>
    %505 = vector.broadcast %270 : vector<1x32xf32> to vector<8x32xf32>
    %506 = arith.addf %504, %505 : vector<8x32xf32>
    %507 = arith.mulf %494, %506 : vector<8x32xf32>
    %508 = arith.addf %503, %507 : vector<8x32xf32>
    %509 = math.tanh %508 : vector<8x32xf32>
    %cst_84 = arith.constant 1.000000e+00 : f32
    %510 = vector.broadcast %cst_84 : f32 to vector<8x32xf32>
    %511 = arith.subf %510, %502 : vector<8x32xf32>
    %512 = arith.mulf %511, %509 : vector<8x32xf32>
    %513 = arith.mulf %502, %484 : vector<8x32xf32>
    %514 = arith.addf %512, %513 : vector<8x32xf32>
    %c0_85 = arith.constant 0 : index
    %c0_86 = arith.constant 0 : index
    %515 = vector.load %arg9[%c0_85, %c0_86] : memref<32x128xf32, #tpu.memory_space<vmem>>, vector<32x128xf32>
    %cst_87 = arith.constant dense<0.000000e+00> : vector<8x128xf32>
    %516 = tpu.matmul %514, %515, %cst_87 {dimension_numbers = #tpu.dot_dimension_numbers<[1], [0], [0], [1], [0, 0, 1, 1], [], []>} : vector<8x32xf32>, vector<32x128xf32>, vector<8x128xf32> -> vector<8x128xf32>
    %c0_88 = arith.constant 0 : index
    %c0_89 = arith.constant 0 : index
    %517 = vector.load %arg10[%c0_88, %c0_89] : memref<1x128xf32, #tpu.memory_space<vmem>>, vector<1x128xf32>
    %518 = vector.broadcast %517 : vector<1x128xf32> to vector<8x128xf32>
    %519 = arith.addf %516, %518 : vector<8x128xf32>
    %cst_90 = arith.constant 0.000000e+00 : f32
    %520 = vector.broadcast %cst_90 : f32 to vector<8x128xf32>
    %521 = arith.cmpf ogt, %519, %520 : vector<8x128xf32>
    %cst_91 = arith.constant 0.00999999977 : f32
    %522 = vector.broadcast %cst_91 : f32 to vector<8x128xf32>
    %523 = arith.mulf %522, %519 : vector<8x128xf32>
    %524 = arith.select %521, %519, %523 : vector<8x128xi1>, vector<8x128xf32>
    %c0_92 = arith.constant 0 : index
    %c0_93 = arith.constant 0 : index
    %525 = vector.load %arg11[%c0_92, %c0_93] : memref<128x128xf32, #tpu.memory_space<vmem>>, vector<128x128xf32>
    %cst_94 = arith.constant dense<0.000000e+00> : vector<8x128xf32>
    %526 = tpu.matmul %524, %525, %cst_94 {dimension_numbers = #tpu.dot_dimension_numbers<[1], [0], [0], [1], [0, 0, 1, 1], [], []>} : vector<8x128xf32>, vector<128x128xf32>, vector<8x128xf32> -> vector<8x128xf32>
    %c0_95 = arith.constant 0 : index
    %c0_96 = arith.constant 0 : index
    %527 = vector.load %arg12[%c0_95, %c0_96] : memref<1x128xf32, #tpu.memory_space<vmem>>, vector<1x128xf32>
    %528 = vector.broadcast %527 : vector<1x128xf32> to vector<8x128xf32>
    %529 = arith.addf %526, %528 : vector<8x128xf32>
    %cst_97 = arith.constant 0.000000e+00 : f32
    %530 = vector.broadcast %cst_97 : f32 to vector<8x128xf32>
    %531 = arith.cmpf ogt, %529, %530 : vector<8x128xf32>
    %cst_98 = arith.constant 0.00999999977 : f32
    %532 = vector.broadcast %cst_98 : f32 to vector<8x128xf32>
    %533 = arith.mulf %532, %529 : vector<8x128xf32>
    %534 = arith.select %531, %529, %533 : vector<8x128xi1>, vector<8x128xf32>
    %c0_99 = arith.constant 0 : index
    %c0_100 = arith.constant 0 : index
    %535 = vector.load %arg13[%c0_99, %c0_100] : memref<128x128xf32, #tpu.memory_space<vmem>>, vector<128x128xf32>
    %cst_101 = arith.constant dense<0.000000e+00> : vector<8x128xf32>
    %536 = tpu.matmul %534, %535, %cst_101 {dimension_numbers = #tpu.dot_dimension_numbers<[1], [0], [0], [1], [0, 0, 1, 1], [], []>} : vector<8x128xf32>, vector<128x128xf32>, vector<8x128xf32> -> vector<8x128xf32>
    %c0_102 = arith.constant 0 : index
    %c0_103 = arith.constant 0 : index
    %537 = vector.load %arg14[%c0_102, %c0_103] : memref<1x128xf32, #tpu.memory_space<vmem>>, vector<1x128xf32>
    %538 = vector.broadcast %537 : vector<1x128xf32> to vector<8x128xf32>
    %539 = arith.addf %536, %538 : vector<8x128xf32>
    %c0_104 = arith.constant 0 : index
    %c0_105 = arith.constant 0 : index
    %540 = vector.load %arg15[%c0_104, %c0_105] : memref<8x128xf32, #tpu.memory_space<vmem>>, vector<8x128xf32>
    tpu.vector_store %arg15[%c0_104, %c0_105], %539 {strides = array<i32>} : memref<8x128xf32, #tpu.memory_space<vmem>>, vector<8x128xf32>,
    return
  }
}

</mosaic_0001>

<llo_original>
// kernel: tpu_custom_call.1
$region0: #{tpu_custom_call.1}
  #allocation0 [shape = 'u32[]', space=smem, size = 0x4, offset = 0x4, fixed_abs, tag = 'smem constant byte address 0x4 - core index']
  #allocation1 [shape = 'u32[72,128]{1,0:T(1,128)}', space=vmem, size = 0x9000, scoped, tag = 'internal scratch']
  %s0 = inlined_call_operand.hbm [shape: f32[8,8,16], index: 0, kind: input, shape index: {}]
  %s1 = inlined_call_operand.hbm [shape: f32[16,96], index: 1, kind: input, shape index: {}]
  %s2 = inlined_call_operand.hbm [shape: f32[32,96], index: 2, kind: input, shape index: {}]
  %s3 = inlined_call_operand.vmem [shape: f32[1,96], index: 3, kind: input, shape index: {}]
  %s4 = inlined_call_operand.vmem [shape: f32[1,32], index: 4, kind: input, shape index: {}]
  %s5 = inlined_call_operand.hbm [shape: f32[32,96], index: 5, kind: input, shape index: {}]
  %s6 = inlined_call_operand.hbm [shape: f32[32,96], index: 6, kind: input, shape index: {}]
  %s7 = inlined_call_operand.vmem [shape: f32[1,96], index: 7, kind: input, shape index: {}]
  %s8 = inlined_call_operand.vmem [shape: f32[1,32], index: 8, kind: input, shape index: {}]
  %s9 = inlined_call_operand.hbm [shape: f32[32,128], index: 9, kind: input, shape index: {}]
  %s10 = inlined_call_operand.vmem [shape: f32[1,128], index: 10, kind: input, shape index: {}]
  %s11 = inlined_call_operand.hbm [shape: f32[128,128], index: 11, kind: input, shape index: {}]
  %s12 = inlined_call_operand.vmem [shape: f32[1,128], index: 12, kind: input, shape index: {}]
  %s13 = inlined_call_operand.hbm [shape: f32[128,128], index: 13, kind: input, shape index: {}]
  %s14 = inlined_call_operand.vmem [shape: f32[1,128], index: 14, kind: input, shape index: {}]
  %s15 = inlined_call_operand.hbm [shape: f32[8,128], index: 15, kind: output, shape index: {}]
  %s16 = sld [smem:[#allocation0]]
  $region102: #{tpu_custom_call.1} parent=0
    _
  %s18 = ssub.s32 1, %s16
  %s19 = scalar_select 0, %s18, %s16
  $region1: #{tpu_custom_call.1} parent=0
    #allocation2 [shape = 'u8[32768]{0}', space=vmem, size = 0x8000, scoped, tag = 'input window, operand 0, single buffered']
    #allocation3 [shape = 's32[1]{0}', space=sflag, size = 0x4, scoped, tag = 'scoped memory for tpu_custom_call.1']
    #allocation4 [shape = 's32[1]{0}', space=sflag, size = 0x4, scoped, tag = 'scoped memory for tpu_custom_call.1']
    #allocation5 [shape = 'u8[8192]{0}', space=vmem, size = 0x2000, scoped, tag = 'input window, operand 1, single buffered']
    #allocation6 [shape = 's32[1]{0}', space=sflag, size = 0x4, scoped, tag = 'scoped memory for tpu_custom_call.1']
    #allocation7 [shape = 'u8[16384]{0}', space=vmem, size = 0x4000, scoped, tag = 'input window, operand 2, single buffered']
    #allocation8 [shape = 'u8[16384]{0}', space=vmem, size = 0x4000, scoped, tag = 'input window, operand 5, single buffered']
    #allocation9 [shape = 's32[1]{0}', space=sflag, size = 0x4, scoped, tag = 'scoped memory for tpu_custom_call.1']
    #allocation10 [shape = 'u8[16384]{0}', space=vmem, size = 0x4000, scoped, tag = 'input window, operand 6, single buffered']
    #allocation11 [shape = 'u8[16384]{0}', space=vmem, size = 0x4000, scoped, tag = 'input window, operand 9, single buffered']
    #allocation12 [shape = 's32[1]{0}', space=sflag, size = 0x4, scoped, tag = 'scoped memory for tpu_custom_call.1']
    #allocation13 [shape = 'u8[65536]{0}', space=vmem, size = 0x10000, scoped, tag = 'input window, operand 11, single buffered']
    #allocation14 [shape = 'u8[65536]{0}', space=vmem, size = 0x10000, scoped, tag = 'input window, operand 13, single buffered']
    #allocation15 [shape = 's32[1]{0}', space=sflag, size = 0x4, scoped, tag = 'scoped memory for tpu_custom_call.1']
    #allocation16 [shape = 'u8[4096]{0}', space=vmem, size = 0x1000, scoped, tag = 'output window, operand 0, single buffered']
    %20 = vsyncpa [#allocation3], 0
    %21 = vsyncpa [#allocation6], 0
    %22 = vsyncpa [#allocation9], 0
    %23 = vsyncpa [#allocation12], 0
    %24 = vsyncpa [#allocation15], 0
    %25 = vsyncpa [#allocation4], 0
    // Predicated region
    $region2: #{tpu_custom_call.1} parent=1 // pred_check
      _
    $region3: #{tpu_custom_call.1} parent=1 // pred_check_branch
      %27 = sbr.rel (0) target = $region5
    $region4: #{tpu_custom_call.1} parent=1 // pred_region
      %29 = vsyncadd [#allocation3], 0
      %s30 = sshll.u32 %s0, 4
      %s31 = int_to_ptr.hbm [resolvable:$true] %s30
      %s32 = sshll.u32 [#allocation2], 4
      %s33 = int_to_ptr.vmem [resolvable:$true] %s32
      %38 = dma.hbm_to_vmem [thread:$0]  %s31, 1024, %s33, [#allocation3], 128, 128, 8
    $region5: #{tpu_custom_call.1} parent=1 // pred_fallthru
      _
    // Predicated region
    $region6: #{tpu_custom_call.1} parent=1 // pred_check
      _
    $region7: #{tpu_custom_call.1} parent=1 // pred_check_branch
      %40 = sbr.rel (0) target = $region9
    $region8: #{tpu_custom_call.1} parent=1 // pred_region
      %42 = vsyncadd [#allocation6], 0
      %s43 = sshll.u32 %s1, 4
      %s44 = int_to_ptr.hbm [resolvable:$true] %s43
      %s45 = sshll.u32 [#allocation5], 4
      %s46 = int_to_ptr.vmem [resolvable:$true] %s45
      %51 = dma.hbm_to_vmem [thread:$0]  %s44, 256, %s46, [#allocation6], 128, 128, 8
    $region9: #{tpu_custom_call.1} parent=1 // pred_fallthru
      _
    // Predicated region
    $region10: #{tpu_custom_call.1} parent=1 // pred_check
      _
    $region11: #{tpu_custom_call.1} parent=1 // pred_check_branch
      %53 = sbr.rel (0) target = $region13
    $region12: #{tpu_custom_call.1} parent=1 // pred_region
      %55 = vsyncadd [#allocation6], 0
      %s56 = sshll.u32 %s2, 4
      %s57 = int_to_ptr.hbm [resolvable:$true] %s56
      %s58 = sshll.u32 [#allocation7], 4
      %s59 = int_to_ptr.vmem [resolvable:$true] %s58
      %64 = dma.hbm_to_vmem [thread:$0]  %s57, 512, %s59, [#allocation6], 128, 128, 8
    $region13: #{tpu_custom_call.1} parent=1 // pred_fallthru
      _
    // Predicated region
    $region14: #{tpu_custom_call.1} parent=1 // pred_check
      _
    $region15: #{tpu_custom_call.1} parent=1 // pred_check_branch
      %66 = sbr.rel (0) target = $region17
    $region16: #{tpu_custom_call.1} parent=1 // pred_region
      _
    $region17: #{tpu_custom_call.1} parent=1 // pred_fallthru
      _
    // Predicated region
    $region18: #{tpu_custom_call.1} parent=1 // pred_check
      _
    $region19: #{tpu_custom_call.1} parent=1 // pred_check_branch
      %68 = sbr.rel (0) target = $region21
    $region20: #{tpu_custom_call.1} parent=1 // pred_region
      _
    $region21: #{tpu_custom_call.1} parent=1 // pred_fallthru
      _
    // Predicated region
    $region22: #{tpu_custom_call.1} parent=1 // pred_check
      _
    $region23: #{tpu_custom_call.1} parent=1 // pred_check_branch
      %70 = sbr.rel (0) target = $region25
    $region24: #{tpu_custom_call.1} parent=1 // pred_region
      %72 = vsyncadd [#allocation9], 0
      %s73 = sshll.u32 %s5, 4
      %s74 = int_to_ptr.hbm [resolvable:$true] %s73
      %s75 = sshll.u32 [#allocation8], 4
      %s76 = int_to_ptr.vmem [resolvable:$true] %s75
      %81 = dma.hbm_to_vmem [thread:$0]  %s74, 512, %s76, [#allocation9], 128, 128, 8
    $region25: #{tpu_custom_call.1} parent=1 // pred_fallthru
      _
    // Predicated region
    $region26: #{tpu_custom_call.1} parent=1 // pred_check
      _
    $region27: #{tpu_custom_call.1} parent=1 // pred_check_branch
      %83 = sbr.rel (0) target = $region29
    $region28: #{tpu_custom_call.1} parent=1 // pred_region
      %85 = vsyncadd [#allocation9], 0
      %s86 = sshll.u32 %s6, 4
      %s87 = int_to_ptr.hbm [resolvable:$true] %s86
      %s88 = sshll.u32 [#allocation10], 4
      %s89 = int_to_ptr.vmem [resolvable:$true] %s88
      %94 = dma.hbm_to_vmem [thread:$0]  %s87, 512, %s89, [#allocation9], 128, 128, 8
    $region29: #{tpu_custom_call.1} parent=1 // pred_fallthru
      _
    // Predicated region
    $region30: #{tpu_custom_call.1} parent=1 // pred_check
      _
    $region31: #{tpu_custom_call.1} parent=1 // pred_check_branch
      %96 = sbr.rel (0) target = $region33
    $region32: #{tpu_custom_call.1} parent=1 // pred_region
      _
    $region33: #{tpu_custom_call.1} parent=1 // pred_fallthru
      _
    // Predicated region
    $region34: #{tpu_custom_call.1} parent=1 // pred_check
      _
    $region35: #{tpu_custom_call.1} parent=1 // pred_check_branch
      %98 = sbr.rel (0) target = $region37
    $region36: #{tpu_custom_call.1} parent=1 // pred_region
      _
    $region37: #{tpu_custom_call.1} parent=1 // pred_fallthru
      _
    // Predicated region
    $region38: #{tpu_custom_call.1} parent=1 // pred_check
      _
    $region39: #{tpu_custom_call.1} parent=1 // pred_check_branch
      %100 = sbr.rel (0) target = $region41
    $region40: #{tpu_custom_call.1} parent=1 // pred_region
      %102 = vsyncadd [#allocation12], 0
      %s103 = sshll.u32 %s9, 4
      %s104 = int_to_ptr.hbm [resolvable:$true] %s103
      %s105 = sshll.u32 [#allocation11], 4
      %s106 = int_to_ptr.vmem [resolvable:$true] %s105
      %111 = dma.hbm_to_vmem [thread:$0]  %s104, 512, %s106, [#allocation12], 128, 128, 8
    $region41: #{tpu_custom_call.1} parent=1 // pred_fallthru
      _
    // Predicated region
    $region42: #{tpu_custom_call.1} parent=1 // pred_check
      _
    $region43: #{tpu_custom_call.1} parent=1 // pred_check_branch
      %113 = sbr.rel (0) target = $region45
    $region44: #{tpu_custom_call.1} parent=1 // pred_region
      _
    $region45: #{tpu_custom_call.1} parent=1 // pred_fallthru
      _
    // Predicated region
    $region46: #{tpu_custom_call.1} parent=1 // pred_check
      _
    $region47: #{tpu_custom_call.1} parent=1 // pred_check_branch
      %115 = sbr.rel (0) target = $region49
    $region48: #{tpu_custom_call.1} parent=1 // pred_region
      %117 = vsyncadd [#allocation12], 0
      %s118 = sshll.u32 %s11, 4
      %s119 = int_to_ptr.hbm [resolvable:$true] %s118
      %s120 = sshll.u32 [#allocation13], 4
      %s121 = int_to_ptr.vmem [resolvable:$true] %s120
      %126 = dma.hbm_to_vmem [thread:$0]  %s119, 2048, %s121, [#allocation12], 128, 128, 8
    $region49: #{tpu_custom_call.1} parent=1 // pred_fallthru
      _
    // Predicated region
    $region50: #{tpu_custom_call.1} parent=1 // pred_check
      _
    $region51: #{tpu_custom_call.1} parent=1 // pred_check_branch
      %128 = sbr.rel (0) target = $region53
    $region52: #{tpu_custom_call.1} parent=1 // pred_region
      _
    $region53: #{tpu_custom_call.1} parent=1 // pred_fallthru
      _
    // Predicated region
    $region54: #{tpu_custom_call.1} parent=1 // pred_check
      _
    $region55: #{tpu_custom_call.1} parent=1 // pred_check_branch
      %130 = sbr.rel (0) target = $region57
    $region56: #{tpu_custom_call.1} parent=1 // pred_region
      %132 = vsyncadd [#allocation15], 0
      %s133 = sshll.u32 %s13, 4
      %s134 = int_to_ptr.hbm [resolvable:$true] %s133
      %s135 = sshll.u32 [#allocation14], 4
      %s136 = int_to_ptr.vmem [resolvable:$true] %s135
      %141 = dma.hbm_to_vmem [thread:$0]  %s134, 2048, %s136, [#allocation15], 128, 128, 8
    $region57: #{tpu_custom_call.1} parent=1 // pred_fallthru
      _
    // Predicated region
    $region58: #{tpu_custom_call.1} parent=1 // pred_check
      _
    $region59: #{tpu_custom_call.1} parent=1 // pred_check_branch
      %143 = sbr.rel (0) target = $region61
    $region60: #{tpu_custom_call.1} parent=1 // pred_region
      _
    $region61: #{tpu_custom_call.1} parent=1 // pred_fallthru
      _
    // Predicated region
    $region62: #{tpu_custom_call.1} parent=1 // pred_check
      _
    $region63: #{tpu_custom_call.1} parent=1 // pred_check_branch
      %145 = sbr.rel (0) target = $region65
    $region64: #{tpu_custom_call.1} parent=1 // pred_region
      %147 = dma.done [#allocation3], 1024
    $region65: #{tpu_custom_call.1} parent=1 // pred_fallthru
      _
    // Predicated region
    $region66: #{tpu_custom_call.1} parent=1 // pred_check
      _
    $region67: #{tpu_custom_call.1} parent=1 // pred_check_branch
      %149 = sbr.rel (0) target = $region69
    $region68: #{tpu_custom_call.1} parent=1 // pred_region
      %151 = dma.done [#allocation6], 256
    $region69: #{tpu_custom_call.1} parent=1 // pred_fallthru
      _
    // Predicated region
    $region70: #{tpu_custom_call.1} parent=1 // pred_check
      _
    $region71: #{tpu_custom_call.1} parent=1 // pred_check_branch
      %153 = sbr.rel (0) target = $region73
    $region72: #{tpu_custom_call.1} parent=1 // pred_region
      %155 = dma.done [#allocation6], 512
    $region73: #{tpu_custom_call.1} parent=1 // pred_fallthru
      _
    // Predicated region
    $region74: #{tpu_custom_call.1} parent=1 // pred_check
      _
    $region75: #{tpu_custom_call.1} parent=1 // pred_check_branch
      %157 = sbr.rel (0) target = $region77
    $region76: #{tpu_custom_call.1} parent=1 // pred_region
      %159 = dma.done [#allocation9], 512
    $region77: #{tpu_custom_call.1} parent=1 // pred_fallthru
      _
    // Predicated region
    $region78: #{tpu_custom_call.1} parent=1 // pred_check
      _
    $region79: #{tpu_custom_call.1} parent=1 // pred_check_branch
      %161 = sbr.rel (0) target = $region81
    $region80: #{tpu_custom_call.1} parent=1 // pred_region
      %163 = dma.done [#allocation9], 512
    $region81: #{tpu_custom_call.1} parent=1 // pred_fallthru
      _
    // Predicated region
    $region82: #{tpu_custom_call.1} parent=1 // pred_check
      _
    $region83: #{tpu_custom_call.1} parent=1 // pred_check_branch
      %165 = sbr.rel (0) target = $region85
    $region84: #{tpu_custom_call.1} parent=1 // pred_region
      %167 = dma.done [#allocation12], 512
    $region85: #{tpu_custom_call.1} parent=1 // pred_fallthru
      _
    // Predicated region
    $region86: #{tpu_custom_call.1} parent=1 // pred_check
      _
    $region87: #{tpu_custom_call.1} parent=1 // pred_check_branch
      %169 = sbr.rel (0) target = $region89
    $region88: #{tpu_custom_call.1} parent=1 // pred_region
      %171 = dma.done [#allocation12], 2048
    $region89: #{tpu_custom_call.1} parent=1 // pred_fallthru
      _
    // Predicated region
    $region90: #{tpu_custom_call.1} parent=1 // pred_check
      _
    $region91: #{tpu_custom_call.1} parent=1 // pred_check_branch
      %173 = sbr.rel (0) target = $region93
    $region92: #{tpu_custom_call.1} parent=1 // pred_region
      %175 = dma.done [#allocation15], 2048
    $region93: #{tpu_custom_call.1} parent=1 // pred_fallthru
      _
    %v176 = vld [vmem:[#allocation2] sm:$0xff]
    %v177 = vld [vmem:[#allocation2 + $0x8] sm:$0xff]
    %v178 = vld [vmem:[#allocation2 + $0x10] sm:$0xff]
    %v179 = vld [vmem:[#allocation2 + $0x18] sm:$0xff]
    %v180 = vld [vmem:[#allocation2 + $0x20] sm:$0xff]
    %v181 = vld [vmem:[#allocation2 + $0x28] sm:$0xff]
    %v182 = vld [vmem:[#allocation2 + $0x30] sm:$0xff]
    %v183 = vld [vmem:[#allocation2 + $0x38] sm:$0xff]
    %v192 = vrot.slane %v177, 7
    %vm193 = vcmask 1041409
    %v194 = vsel %vm193, %v192, %v176
    %v195 = vrot.slane %v178, 6
    %vm196 = vcmask 1042434
    %v197 = vsel %vm196, %v195, %v194
    %v198 = vrot.slane %v179, 5
    %vm199 = vcmask 1043459
    %v200 = vsel %vm199, %v198, %v197
    %v201 = vrot.slane %v180, 4
    %vm202 = vcmask 1044484
    %v203 = vsel %vm202, %v201, %v200
    %v204 = vrot.slane %v181, 3
    %vm205 = vcmask 1045509
    %v206 = vsel %vm205, %v204, %v203
    %v207 = vrot.slane %v182, 2
    %vm208 = vcmask 1046534
    %v209 = vsel %vm208, %v207, %v206
    %v210 = vrot.slane %v183, 1
    %vm211 = vcmask 1047559
    %v212 = vsel %vm211, %v210, %v209
    %v213 = vrot.slane %v176, 1
    %v214 = vsel %vm193, %v177, %v213
    %v215 = vrot.slane %v178, 7
    %v216 = vsel %vm196, %v215, %v214
    %v217 = vrot.slane %v179, 6
    %v218 = vsel %vm199, %v217, %v216
    %v219 = vrot.slane %v180, 5
    %v220 = vsel %vm202, %v219, %v218
    %v221 = vrot.slane %v181, 4
    %v222 = vsel %vm205, %v221, %v220
    %v223 = vrot.slane %v182, 3
    %v224 = vsel %vm208, %v223, %v222
    %v225 = vrot.slane %v183, 2
    %v226 = vsel %vm211, %v225, %v224
    %v227 = vrot.slane %v176, 2
    %v228 = vrot.slane %v177, 1
    %v229 = vsel %vm193, %v228, %v227
    %v230 = vsel %vm196, %v178, %v229
    %v231 = vrot.slane %v179, 7
    %v232 = vsel %vm199, %v231, %v230
    %v233 = vrot.slane %v180, 6
    %v234 = vsel %vm202, %v233, %v232
    %v235 = vrot.slane %v181, 5
    %v236 = vsel %vm205, %v235, %v234
    %v237 = vrot.slane %v182, 4
    %v238 = vsel %vm208, %v237, %v236
    %v239 = vrot.slane %v183, 3
    %v240 = vsel %vm211, %v239, %v238
    %v241 = vrot.slane %v176, 3
    %v242 = vrot.slane %v177, 2
    %v243 = vsel %vm193, %v242, %v241
    %v244 = vrot.slane %v178, 1
    %v245 = vsel %vm196, %v244, %v243
    %v246 = vsel %vm199, %v179, %v245
    %v247 = vrot.slane %v180, 7
    %v248 = vsel %vm202, %v247, %v246
    %v249 = vrot.slane %v181, 6
    %v250 = vsel %vm205, %v249, %v248
    %v251 = vrot.slane %v182, 5
    %v252 = vsel %vm208, %v251, %v250
    %v253 = vrot.slane %v183, 4
    %v254 = vsel %vm211, %v253, %v252
    %v255 = vrot.slane %v176, 4
    %v256 = vrot.slane %v177, 3
    %v257 = vsel %vm193, %v256, %v255
    %v258 = vrot.slane %v178, 2
    %v259 = vsel %vm196, %v258, %v257
    %v260 = vrot.slane %v179, 1
    %v261 = vsel %vm199, %v260, %v259
    %v262 = vsel %vm202, %v180, %v261
    %v263 = vrot.slane %v181, 7
    %v264 = vsel %vm205, %v263, %v262
    %v265 = vrot.slane %v182, 6
    %v266 = vsel %vm208, %v265, %v264
    %v267 = vrot.slane %v183, 5
    %v268 = vsel %vm211, %v267, %v266
    %v269 = vrot.slane %v176, 5
    %v270 = vrot.slane %v177, 4
    %v271 = vsel %vm193, %v270, %v269
    %v272 = vrot.slane %v178, 3
    %v273 = vsel %vm196, %v272, %v271
    %v274 = vrot.slane %v179, 2
    %v275 = vsel %vm199, %v274, %v273
    %v276 = vrot.slane %v180, 1
    %v277 = vsel %vm202, %v276, %v275
    %v278 = vsel %vm205, %v181, %v277
    %v279 = vrot.slane %v182, 7
    %v280 = vsel %vm208, %v279, %v278
    %v281 = vrot.slane %v183, 6
    %v282 = vsel %vm211, %v281, %v280
    %v283 = vrot.slane %v176, 6
    %v284 = vrot.slane %v177, 5
    %v285 = vsel %vm193, %v284, %v283
    %v286 = vrot.slane %v178, 4
    %v287 = vsel %vm196, %v286, %v285
    %v288 = vrot.slane %v179, 3
    %v289 = vsel %vm199, %v288, %v287
    %v290 = vrot.slane %v180, 2
    %v291 = vsel %vm202, %v290, %v289
    %v292 = vrot.slane %v181, 1
    %v293 = vsel %vm205, %v292, %v291
    %v294 = vsel %vm208, %v182, %v293
    %v295 = vrot.slane %v183, 7
    %v296 = vsel %vm211, %v295, %v294
    %v297 = vrot.slane %v176, 7
    %v298 = vrot.slane %v177, 6
    %v299 = vsel %vm193, %v298, %v297
    %v300 = vrot.slane %v178, 5
    %v301 = vsel %vm196, %v300, %v299
    %v302 = vrot.slane %v179, 4
    %v303 = vsel %vm199, %v302, %v301
    %v304 = vrot.slane %v180, 3
    %v305 = vsel %vm202, %v304, %v303
    %v306 = vrot.slane %v181, 2
    %v307 = vsel %vm205, %v306, %v305
    %v308 = vrot.slane %v182, 1
    %v309 = vsel %vm208, %v308, %v307
    %v310 = vsel %vm211, %v183, %v309
    %v311 = vld [vmem:[#allocation5] sm:$0xff]
    %v312 = vld [vmem:[#allocation5 + $0x8] sm:$0xff]
    %v313 = vld [vmem:[#allocation7] sm:$0xff]
    %v314 = vld [vmem:[#allocation7 + $0x8] sm:$0xff]
    %v315 = vld [vmem:[#allocation7 + $0x10] sm:$0xff]
    %v316 = vld [vmem:[#allocation7 + $0x18] sm:$0xff]
    %v317 = vld [vmem:[%s3] sm:$0x1]
    %v318 = vld [vmem:[%s4] sm:$0x1]
    %v320 = vperm.slane %v317, 0
    %vm322 = vcmask 130048
    %v323 = vsel %vm322, %v212, 0
    %v325 = vsel %vm322, %v226, 0
    %v327 = vsel %vm322, %v240, 0
    %v329 = vsel %vm322, %v254, 0
    %v331 = vsel %vm322, %v268, 0
    %v333 = vsel %vm322, %v282, 0
    %v335 = vsel %vm322, %v296, 0
    %v337 = vsel %vm322, %v310, 0
    %339 = vmatpush.msra.mxu0 0.0
    %340 = vmatpush.msra.mxu0 0.0
    %341 = vmatpush.msra.mxu0 0.0
    %342 = vmatpush.msra.mxu0 0.0
    %343 = vmatpush.msra.mxu0 0.0
    %344 = vmatpush.msra.mxu0 0.0
    %345 = vmatpush.msra.mxu0 0.0
    %346 = vmatpush.msra.mxu0 0.0
    %347 = vmatpush.msra.mxu0 0.0
    %348 = vmatpush.msra.mxu0 0.0
    %349 = vmatpush.msra.mxu0 0.0
    %350 = vmatpush.msra.mxu0 0.0
    %351 = vmatpush.msra.mxu0 0.0
    %352 = vmatpush.msra.mxu0 0.0
    %353 = vmatpush.msra.mxu0 %v312
    %354 = vmatpush.msra.mxu0 %v311
    %355 = vmatmul.f32.gmra.mxu0 %v323
    %v356 = vpop.f32.mrf.mxu0
    %v357 = vadd.f32 %v320, %v356
    %358 = vmatmul.f32.gmra.mxu0 %v325
    %v359 = vpop.f32.mrf.mxu0
    %v360 = vadd.f32 %v320, %v359
    %361 = vmatmul.f32.gmra.mxu0 %v327
    %v362 = vpop.f32.mrf.mxu0
    %v363 = vadd.f32 %v320, %v362
    %364 = vmatmul.f32.gmra.mxu0 %v329
    %v365 = vpop.f32.mrf.mxu0
    %v366 = vadd.f32 %v320, %v365
    %367 = vmatmul.f32.gmra.mxu0 %v331
    %v368 = vpop.f32.mrf.mxu0
    %v369 = vadd.f32 %v320, %v368
    %370 = vmatmul.f32.gmra.mxu0 %v333
    %v371 = vpop.f32.mrf.mxu0
    %v372 = vadd.f32 %v320, %v371
    %373 = vmatmul.f32.gmra.mxu0 %v335
    %v374 = vpop.f32.mrf.mxu0
    %v375 = vadd.f32 %v320, %v374
    %376 = vmatmul.f32.gmra.mxu0 %v337
    %v377 = vpop.f32.mrf.mxu0
    %v378 = vadd.f32 %v320, %v377
    %379 = vdwg.mxu0
    %vm380 = vcmask 261120
    %v382 = vsel %vm380, 0.0, 0
    %384 = vmatpush.msra.mxu0 0.0
    %385 = vmatpush.msra.mxu0 0.0
    %386 = vmatpush.msra.mxu0 0.0
    %387 = vmatpush.msra.mxu0 0.0
    %388 = vmatpush.msra.mxu0 0.0
    %389 = vmatpush.msra.mxu0 0.0
    %390 = vmatpush.msra.mxu0 0.0
    %391 = vmatpush.msra.mxu0 0.0
    %392 = vmatpush.msra.mxu0 0.0
    %393 = vmatpush.msra.mxu0 0.0
    %394 = vmatpush.msra.mxu0 0.0
    %395 = vmatpush.msra.mxu0 0.0
    %396 = vmatpush.msra.mxu0 %v316
    %397 = vmatpush.msra.mxu0 %v315
    %398 = vmatpush.msra.mxu0 %v314
    %399 = vmatpush.msra.mxu0 %v313
    %400 = vmatmul.f32.gmra.mxu0 %v382
    %v401 = vpop.f32.mrf.mxu0
    %v402 = vadd.f32 0.0, %v401
    %403 = vdwg.mxu0
    %v404 = vadd.f32 %v357, %v402
    %v405 = vxor.u32 %v404, 2147483648
    %v406 = vmul.f32 %v405, 1.442695
    %v407 = vpow.pop %v406
    %v408 = vadd.f32 %v407, 1.0
    %v409 = vrcp.pop %v408
    %v410 = vmul.f32 %v408, %v409
    %v411 = vsub.f32 1.0, %v410
    %v412 = vmul.f32 %v409, %v411
    %v413 = vadd.f32 %v409, %v412
    %vm414 = vweird.f32 %v408
    %vm415 = vweird.f32 %v409
    %vm416 = vmor %vm414, %vm415
    %v417 = vsel %vm416, %v409, %v413
    %v418 = vand.u32 2147483647, %v408
    %vm419 = vcmp.eq.f32.partialorder %v418, 8.507059e+37
    %v420 = vand.u32 %v408, 2147483648
    %v421 = vor.u32 1.1754944e-38, %v420
    %v422 = vsel %vm419, %v421, %v417
    %v423 = vmul.f32 1.0, %v422
    %v425 = vperm.slane %v318, 0
    %426 = vrot.lane.b32.xlu0 %v425, 64
    %v427 = vpop.permute.xlu0 %426
    %v429 = vadd.f32 %v402, %v427
    %431 = vrot.lane.b32.xlu0 %v429, 64
    %v432 = vpop.permute.xlu0 %431
    %v434 = vmul.f32 %v423, %v432
    %436 = vrot.lane.b32.xlu0 %v434, 64
    %v437 = vpop.permute.xlu0 %436
    %v439 = vadd.f32 %v357, %v437
    %v440 = vtanh.pop %v439
    %v441 = vsub.f32 1.0, %v423
    %443 = vrot.lane.b32.xlu0 %v440, 96
    %v444 = vpop.permute.xlu0 %443
    %v446 = vmul.f32 %v441, %v444
    %v447 = vmul.f32 %v423, 0.0
    %v448 = vadd.f32 %v446, %v447
    %450 = vrot.lane.b32.xlu0 %v448, 96
    %v451 = vpop.permute.xlu0 %450
    %v452 = vsel %vm380, %v451, 0
    %454 = vmatpush.msra.mxu0 0.0
    %455 = vmatpush.msra.mxu0 0.0
    %456 = vmatpush.msra.mxu0 0.0
    %457 = vmatpush.msra.mxu0 0.0
    %458 = vmatpush.msra.mxu0 0.0
    %459 = vmatpush.msra.mxu0 0.0
    %460 = vmatpush.msra.mxu0 0.0
    %461 = vmatpush.msra.mxu0 0.0
    %462 = vmatpush.msra.mxu0 0.0
    %463 = vmatpush.msra.mxu0 0.0
    %464 = vmatpush.msra.mxu0 0.0
    %465 = vmatpush.msra.mxu0 0.0
    %466 = vmatpush.msra.mxu0 %v316
    %467 = vmatpush.msra.mxu0 %v315
    %468 = vmatpush.msra.mxu0 %v314
    %469 = vmatpush.msra.mxu0 %v313
    %470 = vmatmul.f32.gmra.mxu0 %v452
    %v471 = vpop.f32.mrf.mxu0
    %v472 = vadd.f32 0.0, %v471
    %473 = vdwg.mxu0
    %v474 = vadd.f32 %v360, %v472
    %v475 = vxor.u32 %v474, 2147483648
    %v476 = vmul.f32 %v475, 1.442695
    %v477 = vpow.pop %v476
    %v478 = vadd.f32 %v477, 1.0
    %v479 = vrcp.pop %v478
    %v480 = vmul.f32 %v478, %v479
    %v481 = vsub.f32 1.0, %v480
    %v482 = vmul.f32 %v479, %v481
    %v483 = vadd.f32 %v479, %v482
    %vm484 = vweird.f32 %v478
    %vm485 = vweird.f32 %v479
    %vm486 = vmor %vm484, %vm485
    %v487 = vsel %vm486, %v479, %v483
    %v488 = vand.u32 2147483647, %v478
    %vm489 = vcmp.eq.f32.partialorder %v488, 8.507059e+37
    %v490 = vand.u32 %v478, 2147483648
    %v491 = vor.u32 1.1754944e-38, %v490
    %v492 = vsel %vm489, %v491, %v487
    %v493 = vmul.f32 1.0, %v492
    %v494 = vadd.f32 %v472, %v427
    %496 = vrot.lane.b32.xlu0 %v494, 64
    %v497 = vpop.permute.xlu0 %496
    %v499 = vmul.f32 %v493, %v497
    %501 = vrot.lane.b32.xlu0 %v499, 64
    %v502 = vpop.permute.xlu0 %501
    %v504 = vadd.f32 %v360, %v502
    %v505 = vtanh.pop %v504
    %v506 = vsub.f32 1.0, %v493
    %508 = vrot.lane.b32.xlu0 %v505, 96
    %v509 = vpop.permute.xlu0 %508
    %v511 = vmul.f32 %v506, %v509
    %v512 = vmul.f32 %v493, %v448
    %v513 = vadd.f32 %v511, %v512
    %515 = vrot.lane.b32.xlu0 %v513, 96
    %v516 = vpop.permute.xlu0 %515
    %v517 = vsel %vm380, %v516, 0
    %519 = vmatpush.msra.mxu0 0.0
    %520 = vmatpush.msra.mxu0 0.0
    %521 = vmatpush.msra.mxu0 0.0
    %522 = vmatpush.msra.mxu0 0.0
    %523 = vmatpush.msra.mxu0 0.0
    %524 = vmatpush.msra.mxu0 0.0
    %525 = vmatpush.msra.mxu0 0.0
    %526 = vmatpush.msra.mxu0 0.0
    %527 = vmatpush.msra.mxu0 0.0
    %528 = vmatpush.msra.mxu0 0.0
    %529 = vmatpush.msra.mxu0 0.0
    %530 = vmatpush.msra.mxu0 0.0
    %531 = vmatpush.msra.mxu0 %v316
    %532 = vmatpush.msra.mxu0 %v315
    %533 = vmatpush.msra.mxu0 %v314
    %534 = vmatpush.msra.mxu0 %v313
    %535 = vmatmul.f32.gmra.mxu0 %v517
    %v536 = vpop.f32.mrf.mxu0
    %v537 = vadd.f32 0.0, %v536
    %538 = vdwg.mxu0
    %v539 = vadd.f32 %v363, %v537
    %v540 = vxor.u32 %v539, 2147483648
    %v541 = vmul.f32 %v540, 1.442695
    %v542 = vpow.pop %v541
    %v543 = vadd.f32 %v542, 1.0
    %v544 = vrcp.pop %v543
    %v545 = vmul.f32 %v543, %v544
    %v546 = vsub.f32 1.0, %v545
    %v547 = vmul.f32 %v544, %v546
    %v548 = vadd.f32 %v544, %v547
    %vm549 = vweird.f32 %v543
    %vm550 = vweird.f32 %v544
    %vm551 = vmor %vm549, %vm550
    %v552 = vsel %vm551, %v544, %v548
    %v553 = vand.u32 2147483647, %v543
    %vm554 = vcmp.eq.f32.partialorder %v553, 8.507059e+37
    %v555 = vand.u32 %v543, 2147483648
    %v556 = vor.u32 1.1754944e-38, %v555
    %v557 = vsel %vm554, %v556, %v552
    %v558 = vmul.f32 1.0, %v557
    %v559 = vadd.f32 %v537, %v427
    %561 = vrot.lane.b32.xlu0 %v559, 64
    %v562 = vpop.permute.xlu0 %561
    %v564 = vmul.f32 %v558, %v562
    %566 = vrot.lane.b32.xlu0 %v564, 64
    %v567 = vpop.permute.xlu0 %566
    %v569 = vadd.f32 %v363, %v567
    %v570 = vtanh.pop %v569
    %v571 = vsub.f32 1.0, %v558
    %573 = vrot.lane.b32.xlu0 %v570, 96
    %v574 = vpop.permute.xlu0 %573
    %v576 = vmul.f32 %v571, %v574
    %v577 = vmul.f32 %v558, %v513
    %v578 = vadd.f32 %v576, %v577
    %580 = vrot.lane.b32.xlu0 %v578, 96
    %v581 = vpop.permute.xlu0 %580
    %v582 = vsel %vm380, %v581, 0
    %584 = vmatpush.msra.mxu0 0.0
    %585 = vmatpush.msra.mxu0 0.0
    %586 = vmatpush.msra.mxu0 0.0
    %587 = vmatpush.msra.mxu0 0.0
    %588 = vmatpush.msra.mxu0 0.0
    %589 = vmatpush.msra.mxu0 0.0
    %590 = vmatpush.msra.mxu0 0.0
    %591 = vmatpush.msra.mxu0 0.0
    %592 = vmatpush.msra.mxu0 0.0
    %593 = vmatpush.msra.mxu0 0.0
    %594 = vmatpush.msra.mxu0 0.0
    %595 = vmatpush.msra.mxu0 0.0
    %596 = vmatpush.msra.mxu0 %v316
    %597 = vmatpush.msra.mxu0 %v315
    %598 = vmatpush.msra.mxu0 %v314
    %599 = vmatpush.msra.mxu0 %v313
    %600 = vmatmul.f32.gmra.mxu0 %v582
    %v601 = vpop.f32.mrf.mxu0
    %v602 = vadd.f32 0.0, %v601
    %603 = vdwg.mxu0
    %v604 = vadd.f32 %v366, %v602
    %v605 = vxor.u32 %v604, 2147483648
    %v606 = vmul.f32 %v605, 1.442695
    %v607 = vpow.pop %v606
    %v608 = vadd.f32 %v607, 1.0
    %v609 = vrcp.pop %v608
    %v610 = vmul.f32 %v608, %v609
    %v611 = vsub.f32 1.0, %v610
    %v612 = vmul.f32 %v609, %v611
    %v613 = vadd.f32 %v609, %v612
    %vm614 = vweird.f32 %v608
    %vm615 = vweird.f32 %v609
    %vm616 = vmor %vm614, %vm615
    %v617 = vsel %vm616, %v609, %v613
    %v618 = vand.u32 2147483647, %v608
    %vm619 = vcmp.eq.f32.partialorder %v618, 8.507059e+37
    %v620 = vand.u32 %v608, 2147483648
    %v621 = vor.u32 1.1754944e-38, %v620
    %v622 = vsel %vm619, %v621, %v617
    %v623 = vmul.f32 1.0, %v622
    %v624 = vadd.f32 %v602, %v427
    %626 = vrot.lane.b32.xlu0 %v624, 64
    %v627 = vpop.permute.xlu0 %626
    %v629 = vmul.f32 %v623, %v627
    %631 = vrot.lane.b32.xlu0 %v629, 64
    %v632 = vpop.permute.xlu0 %631
    %v634 = vadd.f32 %v366, %v632
    %v635 = vtanh.pop %v634
    %v636 = vsub.f32 1.0, %v623
    %638 = vrot.lane.b32.xlu0 %v635, 96
    %v639 = vpop.permute.xlu0 %638
    %v641 = vmul.f32 %v636, %v639
    %v642 = vmul.f32 %v623, %v578
    %v643 = vadd.f32 %v641, %v642
    %645 = vrot.lane.b32.xlu0 %v643, 96
    %v646 = vpop.permute.xlu0 %645
    %v647 = vsel %vm380, %v646, 0
    %649 = vmatpush.msra.mxu0 0.0
    %650 = vmatpush.msra.mxu0 0.0
    %651 = vmatpush.msra.mxu0 0.0
    %652 = vmatpush.msra.mxu0 0.0
    %653 = vmatpush.msra.mxu0 0.0
    %654 = vmatpush.msra.mxu0 0.0
    %655 = vmatpush.msra.mxu0 0.0
    %656 = vmatpush.msra.mxu0 0.0
    %657 = vmatpush.msra.mxu0 0.0
    %658 = vmatpush.msra.mxu0 0.0
    %659 = vmatpush.msra.mxu0 0.0
    %660 = vmatpush.msra.mxu0 0.0
    %661 = vmatpush.msra.mxu0 %v316
    %662 = vmatpush.msra.mxu0 %v315
    %663 = vmatpush.msra.mxu0 %v314
    %664 = vmatpush.msra.mxu0 %v313
    %665 = vmatmul.f32.gmra.mxu0 %v647
    %v666 = vpop.f32.mrf.mxu0
    %v667 = vadd.f32 0.0, %v666
    %668 = vdwg.mxu0
    %v669 = vadd.f32 %v369, %v667
    %v670 = vxor.u32 %v669, 2147483648
    %v671 = vmul.f32 %v670, 1.442695
    %v672 = vpow.pop %v671
    %v673 = vadd.f32 %v672, 1.0
    %v674 = vrcp.pop %v673
    %v675 = vmul.f32 %v673, %v674
    %v676 = vsub.f32 1.0, %v675
    %v677 = vmul.f32 %v674, %v676
    %v678 = vadd.f32 %v674, %v677
    %vm679 = vweird.f32 %v673
    %vm680 = vweird.f32 %v674
    %vm681 = vmor %vm679, %vm680
    %v682 = vsel %vm681, %v674, %v678
    %v683 = vand.u32 2147483647, %v673
    %vm684 = vcmp.eq.f32.partialorder %v683, 8.507059e+37
    %v685 = vand.u32 %v673, 2147483648
    %v686 = vor.u32 1.1754944e-38, %v685
    %v687 = vsel %vm684, %v686, %v682
    %v688 = vmul.f32 1.0, %v687
    %v689 = vadd.f32 %v667, %v427
    %691 = vrot.lane.b32.xlu0 %v689, 64
    %v692 = vpop.permute.xlu0 %691
    %v694 = vmul.f32 %v688, %v692
    %696 = vrot.lane.b32.xlu0 %v694, 64
    %v697 = vpop.permute.xlu0 %696
    %v699 = vadd.f32 %v369, %v697
    %v700 = vtanh.pop %v699
    %v701 = vsub.f32 1.0, %v688
    %703 = vrot.lane.b32.xlu0 %v700, 96
    %v704 = vpop.permute.xlu0 %703
    %v706 = vmul.f32 %v701, %v704
    %v707 = vmul.f32 %v688, %v643
    %v708 = vadd.f32 %v706, %v707
    %710 = vrot.lane.b32.xlu0 %v708, 96
    %v711 = vpop.permute.xlu0 %710
    %v712 = vsel %vm380, %v711, 0
    %714 = vmatpush.msra.mxu0 0.0
    %715 = vmatpush.msra.mxu0 0.0
    %716 = vmatpush.msra.mxu0 0.0
    %717 = vmatpush.msra.mxu0 0.0
    %718 = vmatpush.msra.mxu0 0.0
    %719 = vmatpush.msra.mxu0 0.0
    %720 = vmatpush.msra.mxu0 0.0
    %721 = vmatpush.msra.mxu0 0.0
    %722 = vmatpush.msra.mxu0 0.0
    %723 = vmatpush.msra.mxu0 0.0
    %724 = vmatpush.msra.mxu0 0.0
    %725 = vmatpush.msra.mxu0 0.0
    %726 = vmatpush.msra.mxu0 %v316
    %727 = vmatpush.msra.mxu0 %v315
    %728 = vmatpush.msra.mxu0 %v314
    %729 = vmatpush.msra.mxu0 %v313
    %730 = vmatmul.f32.gmra.mxu0 %v712
    %v731 = vpop.f32.mrf.mxu0
    %v732 = vadd.f32 0.0, %v731
    %733 = vdwg.mxu0
    %v734 = vadd.f32 %v372, %v732
    %v735 = vxor.u32 %v734, 2147483648
    %v736 = vmul.f32 %v735, 1.442695
    %v737 = vpow.pop %v736
    %v738 = vadd.f32 %v737, 1.0
    %v739 = vrcp.pop %v738
    %v740 = vmul.f32 %v738, %v739
    %v741 = vsub.f32 1.0, %v740
    %v742 = vmul.f32 %v739, %v741
    %v743 = vadd.f32 %v739, %v742
    %vm744 = vweird.f32 %v738
    %vm745 = vweird.f32 %v739
    %vm746 = vmor %vm744, %vm745
    %v747 = vsel %vm746, %v739, %v743
    %v748 = vand.u32 2147483647, %v738
    %vm749 = vcmp.eq.f32.partialorder %v748, 8.507059e+37
    %v750 = vand.u32 %v738, 2147483648
    %v751 = vor.u32 1.1754944e-38, %v750
    %v752 = vsel %vm749, %v751, %v747
    %v753 = vmul.f32 1.0, %v752
    %v754 = vadd.f32 %v732, %v427
    %756 = vrot.lane.b32.xlu0 %v754, 64
    %v757 = vpop.permute.xlu0 %756
    %v759 = vmul.f32 %v753, %v757
    %761 = vrot.lane.b32.xlu0 %v759, 64
    %v762 = vpop.permute.xlu0 %761
    %v764 = vadd.f32 %v372, %v762
    %v765 = vtanh.pop %v764
    %v766 = vsub.f32 1.0, %v753
    %768 = vrot.lane.b32.xlu0 %v765, 96
    %v769 = vpop.permute.xlu0 %768
    %v771 = vmul.f32 %v766, %v769
    %v772 = vmul.f32 %v753, %v708
    %v773 = vadd.f32 %v771, %v772
    %775 = vrot.lane.b32.xlu0 %v773, 96
    %v776 = vpop.permute.xlu0 %775
    %v777 = vsel %vm380, %v776, 0
    %779 = vmatpush.msra.mxu0 0.0
    %780 = vmatpush.msra.mxu0 0.0
    %781 = vmatpush.msra.mxu0 0.0
    %782 = vmatpush.msra.mxu0 0.0
    %783 = vmatpush.msra.mxu0 0.0
    %784 = vmatpush.msra.mxu0 0.0
    %785 = vmatpush.msra.mxu0 0.0
    %786 = vmatpush.msra.mxu0 0.0
    %787 = vmatpush.msra.mxu0 0.0
    %788 = vmatpush.msra.mxu0 0.0
    %789 = vmatpush.msra.mxu0 0.0
    %790 = vmatpush.msra.mxu0 0.0
    %791 = vmatpush.msra.mxu0 %v316
    %792 = vmatpush.msra.mxu0 %v315
    %793 = vmatpush.msra.mxu0 %v314
    %794 = vmatpush.msra.mxu0 %v313
    %795 = vmatmul.f32.gmra.mxu0 %v777
    %v796 = vpop.f32.mrf.mxu0
    %v797 = vadd.f32 0.0, %v796
    %798 = vdwg.mxu0
    %v799 = vadd.f32 %v375, %v797
    %v800 = vxor.u32 %v799, 2147483648
    %v801 = vmul.f32 %v800, 1.442695
    %v802 = vpow.pop %v801
    %v803 = vadd.f32 %v802, 1.0
    %v804 = vrcp.pop %v803
    %v805 = vmul.f32 %v803, %v804
    %v806 = vsub.f32 1.0, %v805
    %v807 = vmul.f32 %v804, %v806
    %v808 = vadd.f32 %v804, %v807
    %vm809 = vweird.f32 %v803
    %vm810 = vweird.f32 %v804
    %vm811 = vmor %vm809, %vm810
    %v812 = vsel %vm811, %v804, %v808
    %v813 = vand.u32 2147483647, %v803
    %vm814 = vcmp.eq.f32.partialorder %v813, 8.507059e+37
    %v815 = vand.u32 %v803, 2147483648
    %v816 = vor.u32 1.1754944e-38, %v815
    %v817 = vsel %vm814, %v816, %v812
    %v818 = vmul.f32 1.0, %v817
    %v819 = vadd.f32 %v797, %v427
    %821 = vrot.lane.b32.xlu0 %v819, 64
    %v822 = vpop.permute.xlu0 %821
    %v824 = vmul.f32 %v818, %v822
    %826 = vrot.lane.b32.xlu0 %v824, 64
    %v827 = vpop.permute.xlu0 %826
    %v829 = vadd.f32 %v375, %v827
    %v830 = vtanh.pop %v829
    %v831 = vsub.f32 1.0, %v818
    %833 = vrot.lane.b32.xlu0 %v830, 96
    %v834 = vpop.permute.xlu0 %833
    %v836 = vmul.f32 %v831, %v834
    %v837 = vmul.f32 %v818, %v773
    %v838 = vadd.f32 %v836, %v837
    %840 = vrot.lane.b32.xlu0 %v838, 96
    %v841 = vpop.permute.xlu0 %840
    %v842 = vsel %vm380, %v841, 0
    %844 = vmatpush.msra.mxu0 0.0
    %845 = vmatpush.msra.mxu0 0.0
    %846 = vmatpush.msra.mxu0 0.0
    %847 = vmatpush.msra.mxu0 0.0
    %848 = vmatpush.msra.mxu0 0.0
    %849 = vmatpush.msra.mxu0 0.0
    %850 = vmatpush.msra.mxu0 0.0
    %851 = vmatpush.msra.mxu0 0.0
    %852 = vmatpush.msra.mxu0 0.0
    %853 = vmatpush.msra.mxu0 0.0
    %854 = vmatpush.msra.mxu0 0.0
    %855 = vmatpush.msra.mxu0 0.0
    %856 = vmatpush.msra.mxu0 %v316
    %857 = vmatpush.msra.mxu0 %v315
    %858 = vmatpush.msra.mxu0 %v314
    %859 = vmatpush.msra.mxu0 %v313
    %860 = vmatmul.f32.gmra.mxu0 %v842
    %v861 = vpop.f32.mrf.mxu0
    %v862 = vadd.f32 0.0, %v861
    %863 = vdwg.mxu0
    %v864 = vadd.f32 %v378, %v862
    %v865 = vxor.u32 %v864, 2147483648
    %v866 = vmul.f32 %v865, 1.442695
    %v867 = vpow.pop %v866
    %v868 = vadd.f32 %v867, 1.0
    %v869 = vrcp.pop %v868
    %v870 = vmul.f32 %v868, %v869
    %v871 = vsub.f32 1.0, %v870
    %v872 = vmul.f32 %v869, %v871
    %v873 = vadd.f32 %v869, %v872
    %vm874 = vweird.f32 %v868
    %vm875 = vweird.f32 %v869
    %vm876 = vmor %vm874, %vm875
    %v877 = vsel %vm876, %v869, %v873
    %v878 = vand.u32 2147483647, %v868
    %vm879 = vcmp.eq.f32.partialorder %v878, 8.507059e+37
    %v880 = vand.u32 %v868, 2147483648
    %v881 = vor.u32 1.1754944e-38, %v880
    %v882 = vsel %vm879, %v881, %v877
    %v883 = vmul.f32 1.0, %v882
    %v884 = vadd.f32 %v862, %v427
    %886 = vrot.lane.b32.xlu0 %v884, 64
    %v887 = vpop.permute.xlu0 %886
    %v889 = vmul.f32 %v883, %v887
    %891 = vrot.lane.b32.xlu0 %v889, 64
    %v892 = vpop.permute.xlu0 %891
    %v894 = vadd.f32 %v378, %v892
    %v895 = vtanh.pop %v894
    %v896 = vsub.f32 1.0, %v883
    %898 = vrot.lane.b32.xlu0 %v895, 96
    %v899 = vpop.permute.xlu0 %898
    %v901 = vmul.f32 %v896, %v899
    %v902 = vmul.f32 %v883, %v838
    %v903 = vadd.f32 %v901, %v902
    %v904 = vld [vmem:[#allocation8] sm:$0xff]
    %v905 = vld [vmem:[#allocation8 + $0x8] sm:$0xff]
    %v906 = vld [vmem:[#allocation8 + $0x10] sm:$0xff]
    %v907 = vld [vmem:[#allocation8 + $0x18] sm:$0xff]
    %v908 = vld [vmem:[#allocation10] sm:$0xff]
    %v909 = vld [vmem:[#allocation10 + $0x8] sm:$0xff]
    %v910 = vld [vmem:[#allocation10 + $0x10] sm:$0xff]
    %v911 = vld [vmem:[#allocation10 + $0x18] sm:$0xff]
    %v912 = vld [vmem:[%s7] sm:$0x1]
    %v913 = vld [vmem:[%s8] sm:$0x1]
    %v915 = vperm.slane %v912, 0
    %918 = vrot.lane.b32.xlu0 %v903, 96
    %v919 = vpop.permute.xlu0 %918
    %v920 = vsel %vm380, %v919, 0
    %922 = vmatpush.msra.mxu0 0.0
    %923 = vmatpush.msra.mxu0 0.0
    %924 = vmatpush.msra.mxu0 0.0
    %925 = vmatpush.msra.mxu0 0.0
    %926 = vmatpush.msra.mxu0 0.0
    %927 = vmatpush.msra.mxu0 0.0
    %928 = vmatpush.msra.mxu0 0.0
    %929 = vmatpush.msra.mxu0 0.0
    %930 = vmatpush.msra.mxu0 0.0
    %931 = vmatpush.msra.mxu0 0.0
    %932 = vmatpush.msra.mxu0 0.0
    %933 = vmatpush.msra.mxu0 0.0
    %934 = vmatpush.msra.mxu0 %v907
    %935 = vmatpush.msra.mxu0 %v906
    %936 = vmatpush.msra.mxu0 %v905
    %937 = vmatpush.msra.mxu0 %v904
    %938 = vmatmul.f32.gmra.mxu0 %v452
    %v939 = vpop.f32.mrf.mxu0
    %v940 = vadd.f32 %v915, %v939
    %941 = vmatmul.f32.gmra.mxu0 %v517
    %v942 = vpop.f32.mrf.mxu0
    %v943 = vadd.f32 %v915, %v942
    %944 = vmatmul.f32.gmra.mxu0 %v582
    %v945 = vpop.f32.mrf.mxu0
    %v946 = vadd.f32 %v915, %v945
    %947 = vmatmul.f32.gmra.mxu0 %v647
    %v948 = vpop.f32.mrf.mxu0
    %v949 = vadd.f32 %v915, %v948
    %950 = vmatmul.f32.gmra.mxu0 %v712
    %v951 = vpop.f32.mrf.mxu0
    %v952 = vadd.f32 %v915, %v951
    %953 = vmatmul.f32.gmra.mxu0 %v777
    %v954 = vpop.f32.mrf.mxu0
    %v955 = vadd.f32 %v915, %v954
    %956 = vmatmul.f32.gmra.mxu0 %v842
    %v957 = vpop.f32.mrf.mxu0
    %v958 = vadd.f32 %v915, %v957
    %959 = vmatmul.f32.gmra.mxu0 %v920
    %v960 = vpop.f32.mrf.mxu0
    %v961 = vadd.f32 %v915, %v960
    %962 = vdwg.mxu0
    %963 = vmatpush.msra.mxu0 0.0
    %964 = vmatpush.msra.mxu0 0.0
    %965 = vmatpush.msra.mxu0 0.0
    %966 = vmatpush.msra.mxu0 0.0
    %967 = vmatpush.msra.mxu0 0.0
    %968 = vmatpush.msra.mxu0 0.0
    %969 = vmatpush.msra.mxu0 0.0
    %970 = vmatpush.msra.mxu0 0.0
    %971 = vmatpush.msra.mxu0 0.0
    %972 = vmatpush.msra.mxu0 0.0
    %973 = vmatpush.msra.mxu0 0.0
    %974 = vmatpush.msra.mxu0 0.0
    %975 = vmatpush.msra.mxu0 %v911
    %976 = vmatpush.msra.mxu0 %v910
    %977 = vmatpush.msra.mxu0 %v909
    %978 = vmatpush.msra.mxu0 %v908
    %979 = vmatmul.f32.gmra.mxu0 %v382
    %v980 = vpop.f32.mrf.mxu0
    %v981 = vadd.f32 0.0, %v980
    %982 = vdwg.mxu0
    %v983 = vadd.f32 %v940, %v981
    %v984 = vxor.u32 %v983, 2147483648
    %v985 = vmul.f32 %v984, 1.442695
    %v986 = vpow.pop %v985
    %v987 = vadd.f32 %v986, 1.0
    %v988 = vrcp.pop %v987
    %v989 = vmul.f32 %v987, %v988
    %v990 = vsub.f32 1.0, %v989
    %v991 = vmul.f32 %v988, %v990
    %v992 = vadd.f32 %v988, %v991
    %vm993 = vweird.f32 %v987
    %vm994 = vweird.f32 %v988
    %vm995 = vmor %vm993, %vm994
    %v996 = vsel %vm995, %v988, %v992
    %v997 = vand.u32 2147483647, %v987
    %vm998 = vcmp.eq.f32.partialorder %v997, 8.507059e+37
    %v999 = vand.u32 %v987, 2147483648
    %v1000 = vor.u32 1.1754944e-38, %v999
    %v1001 = vsel %vm998, %v1000, %v996
    %v1002 = vmul.f32 1.0, %v1001
    %v1004 = vperm.slane %v913, 0
    %1005 = vrot.lane.b32.xlu0 %v1004, 64
    %v1006 = vpop.permute.xlu0 %1005
    %v1008 = vadd.f32 %v981, %v1006
    %1010 = vrot.lane.b32.xlu0 %v1008, 64
    %v1011 = vpop.permute.xlu0 %1010
    %v1013 = vmul.f32 %v1002, %v1011
    %1015 = vrot.lane.b32.xlu0 %v1013, 64
    %v1016 = vpop.permute.xlu0 %1015
    %v1018 = vadd.f32 %v940, %v1016
    %v1019 = vtanh.pop %v1018
    %v1020 = vsub.f32 1.0, %v1002
    %1022 = vrot.lane.b32.xlu0 %v1019, 96
    %v1023 = vpop.permute.xlu0 %1022
    %v1025 = vmul.f32 %v1020, %v1023
    %v1026 = vmul.f32 %v1002, 0.0
    %v1027 = vadd.f32 %v1025, %v1026
    %1029 = vrot.lane.b32.xlu0 %v1027, 96
    %v1030 = vpop.permute.xlu0 %1029
    %v1031 = vsel %vm380, %v1030, 0
    %1033 = vmatpush.msra.mxu0 0.0
    %1034 = vmatpush.msra.mxu0 0.0
    %1035 = vmatpush.msra.mxu0 0.0
    %1036 = vmatpush.msra.mxu0 0.0
    %1037 = vmatpush.msra.mxu0 0.0
    %1038 = vmatpush.msra.mxu0 0.0
    %1039 = vmatpush.msra.mxu0 0.0
    %1040 = vmatpush.msra.mxu0 0.0
    %1041 = vmatpush.msra.mxu0 0.0
    %1042 = vmatpush.msra.mxu0 0.0
    %1043 = vmatpush.msra.mxu0 0.0
    %1044 = vmatpush.msra.mxu0 0.0
    %1045 = vmatpush.msra.mxu0 %v911
    %1046 = vmatpush.msra.mxu0 %v910
    %1047 = vmatpush.msra.mxu0 %v909
    %1048 = vmatpush.msra.mxu0 %v908
    %1049 = vmatmul.f32.gmra.mxu0 %v1031
    %v1050 = vpop.f32.mrf.mxu0
    %v1051 = vadd.f32 0.0, %v1050
    %1052 = vdwg.mxu0
    %v1053 = vadd.f32 %v943, %v1051
    %v1054 = vxor.u32 %v1053, 2147483648
    %v1055 = vmul.f32 %v1054, 1.442695
    %v1056 = vpow.pop %v1055
    %v1057 = vadd.f32 %v1056, 1.0
    %v1058 = vrcp.pop %v1057
    %v1059 = vmul.f32 %v1057, %v1058
    %v1060 = vsub.f32 1.0, %v1059
    %v1061 = vmul.f32 %v1058, %v1060
    %v1062 = vadd.f32 %v1058, %v1061
    %vm1063 = vweird.f32 %v1057
    %vm1064 = vweird.f32 %v1058
    %vm1065 = vmor %vm1063, %vm1064
    %v1066 = vsel %vm1065, %v1058, %v1062
    %v1067 = vand.u32 2147483647, %v1057
    %vm1068 = vcmp.eq.f32.partialorder %v1067, 8.507059e+37
    %v1069 = vand.u32 %v1057, 2147483648
    %v1070 = vor.u32 1.1754944e-38, %v1069
    %v1071 = vsel %vm1068, %v1070, %v1066
    %v1072 = vmul.f32 1.0, %v1071
    %v1073 = vadd.f32 %v1051, %v1006
    %1075 = vrot.lane.b32.xlu0 %v1073, 64
    %v1076 = vpop.permute.xlu0 %1075
    %v1078 = vmul.f32 %v1072, %v1076
    %1080 = vrot.lane.b32.xlu0 %v1078, 64
    %v1081 = vpop.permute.xlu0 %1080
    %v1083 = vadd.f32 %v943, %v1081
    %v1084 = vtanh.pop %v1083
    %v1085 = vsub.f32 1.0, %v1072
    %1087 = vrot.lane.b32.xlu0 %v1084, 96
    %v1088 = vpop.permute.xlu0 %1087
    %v1090 = vmul.f32 %v1085, %v1088
    %v1091 = vmul.f32 %v1072, %v1027
    %v1092 = vadd.f32 %v1090, %v1091
    %1094 = vrot.lane.b32.xlu0 %v1092, 96
    %v1095 = vpop.permute.xlu0 %1094
    %v1096 = vsel %vm380, %v1095, 0
    %1098 = vmatpush.msra.mxu0 0.0
    %1099 = vmatpush.msra.mxu0 0.0
    %1100 = vmatpush.msra.mxu0 0.0
    %1101 = vmatpush.msra.mxu0 0.0
    %1102 = vmatpush.msra.mxu0 0.0
    %1103 = vmatpush.msra.mxu0 0.0
    %1104 = vmatpush.msra.mxu0 0.0
    %1105 = vmatpush.msra.mxu0 0.0
    %1106 = vmatpush.msra.mxu0 0.0
    %1107 = vmatpush.msra.mxu0 0.0
    %1108 = vmatpush.msra.mxu0 0.0
    %1109 = vmatpush.msra.mxu0 0.0
    %1110 = vmatpush.msra.mxu0 %v911
    %1111 = vmatpush.msra.mxu0 %v910
    %1112 = vmatpush.msra.mxu0 %v909
    %1113 = vmatpush.msra.mxu0 %v908
    %1114 = vmatmul.f32.gmra.mxu0 %v1096
    %v1115 = vpop.f32.mrf.mxu0
    %v1116 = vadd.f32 0.0, %v1115
    %1117 = vdwg.mxu0
    %v1118 = vadd.f32 %v946, %v1116
    %v1119 = vxor.u32 %v1118, 2147483648
    %v1120 = vmul.f32 %v1119, 1.442695
    %v1121 = vpow.pop %v1120
    %v1122 = vadd.f32 %v1121, 1.0
    %v1123 = vrcp.pop %v1122
    %v1124 = vmul.f32 %v1122, %v1123
    %v1125 = vsub.f32 1.0, %v1124
    %v1126 = vmul.f32 %v1123, %v1125
    %v1127 = vadd.f32 %v1123, %v1126
    %vm1128 = vweird.f32 %v1122
    %vm1129 = vweird.f32 %v1123
    %vm1130 = vmor %vm1128, %vm1129
    %v1131 = vsel %vm1130, %v1123, %v1127
    %v1132 = vand.u32 2147483647, %v1122
    %vm1133 = vcmp.eq.f32.partialorder %v1132, 8.507059e+37
    %v1134 = vand.u32 %v1122, 2147483648
    %v1135 = vor.u32 1.1754944e-38, %v1134
    %v1136 = vsel %vm1133, %v1135, %v1131
    %v1137 = vmul.f32 1.0, %v1136
    %v1138 = vadd.f32 %v1116, %v1006
    %1140 = vrot.lane.b32.xlu0 %v1138, 64
    %v1141 = vpop.permute.xlu0 %1140
    %v1143 = vmul.f32 %v1137, %v1141
    %1145 = vrot.lane.b32.xlu0 %v1143, 64
    %v1146 = vpop.permute.xlu0 %1145
    %v1148 = vadd.f32 %v946, %v1146
    %v1149 = vtanh.pop %v1148
    %v1150 = vsub.f32 1.0, %v1137
    %1152 = vrot.lane.b32.xlu0 %v1149, 96
    %v1153 = vpop.permute.xlu0 %1152
    %v1155 = vmul.f32 %v1150, %v1153
    %v1156 = vmul.f32 %v1137, %v1092
    %v1157 = vadd.f32 %v1155, %v1156
    %1159 = vrot.lane.b32.xlu0 %v1157, 96
    %v1160 = vpop.permute.xlu0 %1159
    %v1161 = vsel %vm380, %v1160, 0
    %1163 = vmatpush.msra.mxu0 0.0
    %1164 = vmatpush.msra.mxu0 0.0
    %1165 = vmatpush.msra.mxu0 0.0
    %1166 = vmatpush.msra.mxu0 0.0
    %1167 = vmatpush.msra.mxu0 0.0
    %1168 = vmatpush.msra.mxu0 0.0
    %1169 = vmatpush.msra.mxu0 0.0
    %1170 = vmatpush.msra.mxu0 0.0
    %1171 = vmatpush.msra.mxu0 0.0
    %1172 = vmatpush.msra.mxu0 0.0
    %1173 = vmatpush.msra.mxu0 0.0
    %1174 = vmatpush.msra.mxu0 0.0
    %1175 = vmatpush.msra.mxu0 %v911
    %1176 = vmatpush.msra.mxu0 %v910
    %1177 = vmatpush.msra.mxu0 %v909
    %1178 = vmatpush.msra.mxu0 %v908
    %1179 = vmatmul.f32.gmra.mxu0 %v1161
    %v1180 = vpop.f32.mrf.mxu0
    %v1181 = vadd.f32 0.0, %v1180
    %1182 = vdwg.mxu0
    %v1183 = vadd.f32 %v949, %v1181
    %v1184 = vxor.u32 %v1183, 2147483648
    %v1185 = vmul.f32 %v1184, 1.442695
    %v1186 = vpow.pop %v1185
    %v1187 = vadd.f32 %v1186, 1.0
    %v1188 = vrcp.pop %v1187
    %v1189 = vmul.f32 %v1187, %v1188
    %v1190 = vsub.f32 1.0, %v1189
    %v1191 = vmul.f32 %v1188, %v1190
    %v1192 = vadd.f32 %v1188, %v1191
    %vm1193 = vweird.f32 %v1187
    %vm1194 = vweird.f32 %v1188
    %vm1195 = vmor %vm1193, %vm1194
    %v1196 = vsel %vm1195, %v1188, %v1192
    %v1197 = vand.u32 2147483647, %v1187
    %vm1198 = vcmp.eq.f32.partialorder %v1197, 8.507059e+37
    %v1199 = vand.u32 %v1187, 2147483648
    %v1200 = vor.u32 1.1754944e-38, %v1199
    %v1201 = vsel %vm1198, %v1200, %v1196
    %v1202 = vmul.f32 1.0, %v1201
    %v1203 = vadd.f32 %v1181, %v1006
    %1205 = vrot.lane.b32.xlu0 %v1203, 64
    %v1206 = vpop.permute.xlu0 %1205
    %v1208 = vmul.f32 %v1202, %v1206
    %1210 = vrot.lane.b32.xlu0 %v1208, 64
    %v1211 = vpop.permute.xlu0 %1210
    %v1213 = vadd.f32 %v949, %v1211
    %v1214 = vtanh.pop %v1213
    %v1215 = vsub.f32 1.0, %v1202
    %1217 = vrot.lane.b32.xlu0 %v1214, 96
    %v1218 = vpop.permute.xlu0 %1217
    %v1220 = vmul.f32 %v1215, %v1218
    %v1221 = vmul.f32 %v1202, %v1157
    %v1222 = vadd.f32 %v1220, %v1221
    %1224 = vrot.lane.b32.xlu0 %v1222, 96
    %v1225 = vpop.permute.xlu0 %1224
    %v1226 = vsel %vm380, %v1225, 0
    %1228 = vmatpush.msra.mxu0 0.0
    %1229 = vmatpush.msra.mxu0 0.0
    %1230 = vmatpush.msra.mxu0 0.0
    %1231 = vmatpush.msra.mxu0 0.0
    %1232 = vmatpush.msra.mxu0 0.0
    %1233 = vmatpush.msra.mxu0 0.0
    %1234 = vmatpush.msra.mxu0 0.0
    %1235 = vmatpush.msra.mxu0 0.0
    %1236 = vmatpush.msra.mxu0 0.0
    %1237 = vmatpush.msra.mxu0 0.0
    %1238 = vmatpush.msra.mxu0 0.0
    %1239 = vmatpush.msra.mxu0 0.0
    %1240 = vmatpush.msra.mxu0 %v911
    %1241 = vmatpush.msra.mxu0 %v910
    %1242 = vmatpush.msra.mxu0 %v909
    %1243 = vmatpush.msra.mxu0 %v908
    %1244 = vmatmul.f32.gmra.mxu0 %v1226
    %v1245 = vpop.f32.mrf.mxu0
    %v1246 = vadd.f32 0.0, %v1245
    %1247 = vdwg.mxu0
    %v1248 = vadd.f32 %v952, %v1246
    %v1249 = vxor.u32 %v1248, 2147483648
    %v1250 = vmul.f32 %v1249, 1.442695
    %v1251 = vpow.pop %v1250
    %v1252 = vadd.f32 %v1251, 1.0
    %v1253 = vrcp.pop %v1252
    %v1254 = vmul.f32 %v1252, %v1253
    %v1255 = vsub.f32 1.0, %v1254
    %v1256 = vmul.f32 %v1253, %v1255
    %v1257 = vadd.f32 %v1253, %v1256
    %vm1258 = vweird.f32 %v1252
    %vm1259 = vweird.f32 %v1253
    %vm1260 = vmor %vm1258, %vm1259
    %v1261 = vsel %vm1260, %v1253, %v1257
    %v1262 = vand.u32 2147483647, %v1252
    %vm1263 = vcmp.eq.f32.partialorder %v1262, 8.507059e+37
    %v1264 = vand.u32 %v1252, 2147483648
    %v1265 = vor.u32 1.1754944e-38, %v1264
    %v1266 = vsel %vm1263, %v1265, %v1261
    %v1267 = vmul.f32 1.0, %v1266
    %v1268 = vadd.f32 %v1246, %v1006
    %1270 = vrot.lane.b32.xlu0 %v1268, 64
    %v1271 = vpop.permute.xlu0 %1270
    %v1273 = vmul.f32 %v1267, %v1271
    %1275 = vrot.lane.b32.xlu0 %v1273, 64
    %v1276 = vpop.permute.xlu0 %1275
    %v1278 = vadd.f32 %v952, %v1276
    %v1279 = vtanh.pop %v1278
    %v1280 = vsub.f32 1.0, %v1267
    %1282 = vrot.lane.b32.xlu0 %v1279, 96
    %v1283 = vpop.permute.xlu0 %1282
    %v1285 = vmul.f32 %v1280, %v1283
    %v1286 = vmul.f32 %v1267, %v1222
    %v1287 = vadd.f32 %v1285, %v1286
    %1289 = vrot.lane.b32.xlu0 %v1287, 96
    %v1290 = vpop.permute.xlu0 %1289
    %v1291 = vsel %vm380, %v1290, 0
    %1293 = vmatpush.msra.mxu0 0.0
    %1294 = vmatpush.msra.mxu0 0.0
    %1295 = vmatpush.msra.mxu0 0.0
    %1296 = vmatpush.msra.mxu0 0.0
    %1297 = vmatpush.msra.mxu0 0.0
    %1298 = vmatpush.msra.mxu0 0.0
    %1299 = vmatpush.msra.mxu0 0.0
    %1300 = vmatpush.msra.mxu0 0.0
    %1301 = vmatpush.msra.mxu0 0.0
    %1302 = vmatpush.msra.mxu0 0.0
    %1303 = vmatpush.msra.mxu0 0.0
    %1304 = vmatpush.msra.mxu0 0.0
    %1305 = vmatpush.msra.mxu0 %v911
    %1306 = vmatpush.msra.mxu0 %v910
    %1307 = vmatpush.msra.mxu0 %v909
    %1308 = vmatpush.msra.mxu0 %v908
    %1309 = vmatmul.f32.gmra.mxu0 %v1291
    %v1310 = vpop.f32.mrf.mxu0
    %v1311 = vadd.f32 0.0, %v1310
    %1312 = vdwg.mxu0
    %v1313 = vadd.f32 %v955, %v1311
    %v1314 = vxor.u32 %v1313, 2147483648
    %v1315 = vmul.f32 %v1314, 1.442695
    %v1316 = vpow.pop %v1315
    %v1317 = vadd.f32 %v1316, 1.0
    %v1318 = vrcp.pop %v1317
    %v1319 = vmul.f32 %v1317, %v1318
    %v1320 = vsub.f32 1.0, %v1319
    %v1321 = vmul.f32 %v1318, %v1320
    %v1322 = vadd.f32 %v1318, %v1321
    %vm1323 = vweird.f32 %v1317
    %vm1324 = vweird.f32 %v1318
    %vm1325 = vmor %vm1323, %vm1324
    %v1326 = vsel %vm1325, %v1318, %v1322
    %v1327 = vand.u32 2147483647, %v1317
    %vm1328 = vcmp.eq.f32.partialorder %v1327, 8.507059e+37
    %v1329 = vand.u32 %v1317, 2147483648
    %v1330 = vor.u32 1.1754944e-38, %v1329
    %v1331 = vsel %vm1328, %v1330, %v1326
    %v1332 = vmul.f32 1.0, %v1331
    %v1333 = vadd.f32 %v1311, %v1006
    %1335 = vrot.lane.b32.xlu0 %v1333, 64
    %v1336 = vpop.permute.xlu0 %1335
    %v1338 = vmul.f32 %v1332, %v1336
    %1340 = vrot.lane.b32.xlu0 %v1338, 64
    %v1341 = vpop.permute.xlu0 %1340
    %v1343 = vadd.f32 %v955, %v1341
    %v1344 = vtanh.pop %v1343
    %v1345 = vsub.f32 1.0, %v1332
    %1347 = vrot.lane.b32.xlu0 %v1344, 96
    %v1348 = vpop.permute.xlu0 %1347
    %v1350 = vmul.f32 %v1345, %v1348
    %v1351 = vmul.f32 %v1332, %v1287
    %v1352 = vadd.f32 %v1350, %v1351
    %1354 = vrot.lane.b32.xlu0 %v1352, 96
    %v1355 = vpop.permute.xlu0 %1354
    %v1356 = vsel %vm380, %v1355, 0
    %1358 = vmatpush.msra.mxu0 0.0
    %1359 = vmatpush.msra.mxu0 0.0
    %1360 = vmatpush.msra.mxu0 0.0
    %1361 = vmatpush.msra.mxu0 0.0
    %1362 = vmatpush.msra.mxu0 0.0
    %1363 = vmatpush.msra.mxu0 0.0
    %1364 = vmatpush.msra.mxu0 0.0
    %1365 = vmatpush.msra.mxu0 0.0
    %1366 = vmatpush.msra.mxu0 0.0
    %1367 = vmatpush.msra.mxu0 0.0
    %1368 = vmatpush.msra.mxu0 0.0
    %1369 = vmatpush.msra.mxu0 0.0
    %1370 = vmatpush.msra.mxu0 %v911
    %1371 = vmatpush.msra.mxu0 %v910
    %1372 = vmatpush.msra.mxu0 %v909
    %1373 = vmatpush.msra.mxu0 %v908
    %1374 = vmatmul.f32.gmra.mxu0 %v1356
    %v1375 = vpop.f32.mrf.mxu0
    %v1376 = vadd.f32 0.0, %v1375
    %1377 = vdwg.mxu0
    %v1378 = vadd.f32 %v958, %v1376
    %v1379 = vxor.u32 %v1378, 2147483648
    %v1380 = vmul.f32 %v1379, 1.442695
    %v1381 = vpow.pop %v1380
    %v1382 = vadd.f32 %v1381, 1.0
    %v1383 = vrcp.pop %v1382
    %v1384 = vmul.f32 %v1382, %v1383
    %v1385 = vsub.f32 1.0, %v1384
    %v1386 = vmul.f32 %v1383, %v1385
    %v1387 = vadd.f32 %v1383, %v1386
    %vm1388 = vweird.f32 %v1382
    %vm1389 = vweird.f32 %v1383
    %vm1390 = vmor %vm1388, %vm1389
    %v1391 = vsel %vm1390, %v1383, %v1387
    %v1392 = vand.u32 2147483647, %v1382
    %vm1393 = vcmp.eq.f32.partialorder %v1392, 8.507059e+37
    %v1394 = vand.u32 %v1382, 2147483648
    %v1395 = vor.u32 1.1754944e-38, %v1394
    %v1396 = vsel %vm1393, %v1395, %v1391
    %v1397 = vmul.f32 1.0, %v1396
    %v1398 = vadd.f32 %v1376, %v1006
    %1400 = vrot.lane.b32.xlu0 %v1398, 64
    %v1401 = vpop.permute.xlu0 %1400
    %v1403 = vmul.f32 %v1397, %v1401
    %1405 = vrot.lane.b32.xlu0 %v1403, 64
    %v1406 = vpop.permute.xlu0 %1405
    %v1408 = vadd.f32 %v958, %v1406
    %v1409 = vtanh.pop %v1408
    %v1410 = vsub.f32 1.0, %v1397
    %1412 = vrot.lane.b32.xlu0 %v1409, 96
    %v1413 = vpop.permute.xlu0 %1412
    %v1415 = vmul.f32 %v1410, %v1413
    %v1416 = vmul.f32 %v1397, %v1352
    %v1417 = vadd.f32 %v1415, %v1416
    %1419 = vrot.lane.b32.xlu0 %v1417, 96
    %v1420 = vpop.permute.xlu0 %1419
    %v1421 = vsel %vm380, %v1420, 0
    %1423 = vmatpush.msra.mxu0 0.0
    %1424 = vmatpush.msra.mxu0 0.0
    %1425 = vmatpush.msra.mxu0 0.0
    %1426 = vmatpush.msra.mxu0 0.0
    %1427 = vmatpush.msra.mxu0 0.0
    %1428 = vmatpush.msra.mxu0 0.0
    %1429 = vmatpush.msra.mxu0 0.0
    %1430 = vmatpush.msra.mxu0 0.0
    %1431 = vmatpush.msra.mxu0 0.0
    %1432 = vmatpush.msra.mxu0 0.0
    %1433 = vmatpush.msra.mxu0 0.0
    %1434 = vmatpush.msra.mxu0 0.0
    %1435 = vmatpush.msra.mxu0 %v911
    %1436 = vmatpush.msra.mxu0 %v910
    %1437 = vmatpush.msra.mxu0 %v909
    %1438 = vmatpush.msra.mxu0 %v908
    %1439 = vmatmul.f32.gmra.mxu0 %v1421
    %v1440 = vpop.f32.mrf.mxu0
    %v1441 = vadd.f32 0.0, %v1440
    %1442 = vdwg.mxu0
    %v1443 = vadd.f32 %v961, %v1441
    %v1444 = vxor.u32 %v1443, 2147483648
    %v1445 = vmul.f32 %v1444, 1.442695
    %v1446 = vpow.pop %v1445
    %v1447 = vadd.f32 %v1446, 1.0
    %v1448 = vrcp.pop %v1447
    %v1449 = vmul.f32 %v1447, %v1448
    %v1450 = vsub.f32 1.0, %v1449
    %v1451 = vmul.f32 %v1448, %v1450
    %v1452 = vadd.f32 %v1448, %v1451
    %vm1453 = vweird.f32 %v1447
    %vm1454 = vweird.f32 %v1448
    %vm1455 = vmor %vm1453, %vm1454
    %v1456 = vsel %vm1455, %v1448, %v1452
    %v1457 = vand.u32 2147483647, %v1447
    %vm1458 = vcmp.eq.f32.partialorder %v1457, 8.507059e+37
    %v1459 = vand.u32 %v1447, 2147483648
    %v1460 = vor.u32 1.1754944e-38, %v1459
    %v1461 = vsel %vm1458, %v1460, %v1456
    %v1462 = vmul.f32 1.0, %v1461
    %v1463 = vadd.f32 %v1441, %v1006
    %1465 = vrot.lane.b32.xlu0 %v1463, 64
    %v1466 = vpop.permute.xlu0 %1465
    %v1468 = vmul.f32 %v1462, %v1466
    %1470 = vrot.lane.b32.xlu0 %v1468, 64
    %v1471 = vpop.permute.xlu0 %1470
    %v1473 = vadd.f32 %v961, %v1471
    %v1474 = vtanh.pop %v1473
    %v1475 = vsub.f32 1.0, %v1462
    %1477 = vrot.lane.b32.xlu0 %v1474, 96
    %v1478 = vpop.permute.xlu0 %1477
    %v1480 = vmul.f32 %v1475, %v1478
    %v1481 = vmul.f32 %v1462, %v1417
    %v1482 = vadd.f32 %v1480, %v1481
    %v1483 = vld [vmem:[#allocation11] sm:$0xff]
    %v1484 = vld [vmem:[#allocation11 + $0x8] sm:$0xff]
    %v1485 = vld [vmem:[#allocation11 + $0x10] sm:$0xff]
    %v1486 = vld [vmem:[#allocation11 + $0x18] sm:$0xff]
    %v1487 = vld [vmem:[%s10] sm:$0x1]
    %v1489 = vperm.slane %v1487, 0
    %1492 = vrot.lane.b32.xlu0 %v1482, 96
    %v1493 = vpop.permute.xlu0 %1492
    %v1494 = vsel %vm380, %v1493, 0
    %1496 = vmatpush.msra.mxu0 0.0
    %1497 = vmatpush.msra.mxu0 0.0
    %1498 = vmatpush.msra.mxu0 0.0
    %1499 = vmatpush.msra.mxu0 0.0
    %1500 = vmatpush.msra.mxu0 0.0
    %1501 = vmatpush.msra.mxu0 0.0
    %1502 = vmatpush.msra.mxu0 0.0
    %1503 = vmatpush.msra.mxu0 0.0
    %1504 = vmatpush.msra.mxu0 0.0
    %1505 = vmatpush.msra.mxu0 0.0
    %1506 = vmatpush.msra.mxu0 0.0
    %1507 = vmatpush.msra.mxu0 0.0
    %1508 = vmatpush.msra.mxu0 %v1486
    %1509 = vmatpush.msra.mxu0 %v1485
    %1510 = vmatpush.msra.mxu0 %v1484
    %1511 = vmatpush.msra.mxu0 %v1483
    %1512 = vmatmul.f32.gmra.mxu0 %v1494
    %v1513 = vpop.f32.mrf.mxu0
    %v1514 = vadd.f32 %v1489, %v1513
    %1515 = vdwg.mxu0
    %vm1516 = vcmp.gt.f32.partialorder %v1514, 0.0
    %v1517 = vmul.f32 %v1514, 0.01
    %v1518 = vsel %vm1516, %v1514, %v1517
    %v1519 = vld [vmem:[#allocation13] sm:$0xff]
    %v1520 = vld [vmem:[#allocation13 + $0x8] sm:$0xff]
    %v1521 = vld [vmem:[#allocation13 + $0x10] sm:$0xff]
    %v1522 = vld [vmem:[#allocation13 + $0x18] sm:$0xff]
    %v1523 = vld [vmem:[#allocation13 + $0x20] sm:$0xff]
    %v1524 = vld [vmem:[#allocation13 + $0x28] sm:$0xff]
    %v1525 = vld [vmem:[#allocation13 + $0x30] sm:$0xff]
    %v1526 = vld [vmem:[#allocation13 + $0x38] sm:$0xff]
    %v1527 = vld [vmem:[#allocation13 + $0x40] sm:$0xff]
    %v1528 = vld [vmem:[#allocation13 + $0x48] sm:$0xff]
    %v1529 = vld [vmem:[#allocation13 + $0x50] sm:$0xff]
    %v1530 = vld [vmem:[#allocation13 + $0x58] sm:$0xff]
    %v1531 = vld [vmem:[#allocation13 + $0x60] sm:$0xff]
    %v1532 = vld [vmem:[#allocation13 + $0x68] sm:$0xff]
    %v1533 = vld [vmem:[#allocation13 + $0x70] sm:$0xff]
    %v1534 = vld [vmem:[#allocation13 + $0x78] sm:$0xff]
    %v1535 = vld [vmem:[%s12] sm:$0x1]
    %v1537 = vperm.slane %v1535, 0
    %1539 = vmatpush.msra.mxu0 %v1534
    %1540 = vmatpush.msra.mxu0 %v1533
    %1541 = vmatpush.msra.mxu0 %v1532
    %1542 = vmatpush.msra.mxu0 %v1531
    %1543 = vmatpush.msra.mxu0 %v1530
    %1544 = vmatpush.msra.mxu0 %v1529
    %1545 = vmatpush.msra.mxu0 %v1528
    %1546 = vmatpush.msra.mxu0 %v1527
    %1547 = vmatpush.msra.mxu0 %v1526
    %1548 = vmatpush.msra.mxu0 %v1525
    %1549 = vmatpush.msra.mxu0 %v1524
    %1550 = vmatpush.msra.mxu0 %v1523
    %1551 = vmatpush.msra.mxu0 %v1522
    %1552 = vmatpush.msra.mxu0 %v1521
    %1553 = vmatpush.msra.mxu0 %v1520
    %1554 = vmatpush.msra.mxu0 %v1519
    %1555 = vmatmul.f32.gmra.mxu0 %v1518
    %v1556 = vpop.f32.mrf.mxu0
    %v1557 = vadd.f32 %v1537, %v1556
    %1558 = vdwg.mxu0
    %vm1559 = vcmp.gt.f32.partialorder %v1557, 0.0
    %v1560 = vmul.f32 %v1557, 0.01
    %v1561 = vsel %vm1559, %v1557, %v1560
    %v1562 = vld [vmem:[#allocation14] sm:$0xff]
    %v1563 = vld [vmem:[#allocation14 + $0x8] sm:$0xff]
    %v1564 = vld [vmem:[#allocation14 + $0x10] sm:$0xff]
    %v1565 = vld [vmem:[#allocation14 + $0x18] sm:$0xff]
    %v1566 = vld [vmem:[#allocation14 + $0x20] sm:$0xff]
    %v1567 = vld [vmem:[#allocation14 + $0x28] sm:$0xff]
    %v1568 = vld [vmem:[#allocation14 + $0x30] sm:$0xff]
    %v1569 = vld [vmem:[#allocation14 + $0x38] sm:$0xff]
    %v1570 = vld [vmem:[#allocation14 + $0x40] sm:$0xff]
    %v1571 = vld [vmem:[#allocation14 + $0x48] sm:$0xff]
    %v1572 = vld [vmem:[#allocation14 + $0x50] sm:$0xff]
    %v1573 = vld [vmem:[#allocation14 + $0x58] sm:$0xff]
    %v1574 = vld [vmem:[#allocation14 + $0x60] sm:$0xff]
    %v1575 = vld [vmem:[#allocation14 + $0x68] sm:$0xff]
    %v1576 = vld [vmem:[#allocation14 + $0x70] sm:$0xff]
    %v1577 = vld [vmem:[#allocation14 + $0x78] sm:$0xff]
    %v1578 = vld [vmem:[%s14] sm:$0x1]
    %v1580 = vperm.slane %v1578, 0
    %1582 = vmatpush.msra.mxu0 %v1577
    %1583 = vmatpush.msra.mxu0 %v1576
    %1584 = vmatpush.msra.mxu0 %v1575
    %1585 = vmatpush.msra.mxu0 %v1574
    %1586 = vmatpush.msra.mxu0 %v1573
    %1587 = vmatpush.msra.mxu0 %v1572
    %1588 = vmatpush.msra.mxu0 %v1571
    %1589 = vmatpush.msra.mxu0 %v1570
    %1590 = vmatpush.msra.mxu0 %v1569
    %1591 = vmatpush.msra.mxu0 %v1568
    %1592 = vmatpush.msra.mxu0 %v1567
    %1593 = vmatpush.msra.mxu0 %v1566
    %1594 = vmatpush.msra.mxu0 %v1565
    %1595 = vmatpush.msra.mxu0 %v1564
    %1596 = vmatpush.msra.mxu0 %v1563
    %1597 = vmatpush.msra.mxu0 %v1562
    %1598 = vmatmul.f32.gmra.mxu0 %v1561
    %v1599 = vpop.f32.mrf.mxu0
    %v1600 = vadd.f32 %v1580, %v1599
    %1601 = vdwg.mxu0
    %1602 = vst [vmem:[#allocation16] sm:$0xff] %v1600
    // Predicated region
    $region94: #{tpu_custom_call.1} parent=1 // pred_check
      _
    $region95: #{tpu_custom_call.1} parent=1 // pred_check_branch
      %1604 = sbr.rel (0) target = $region97
    $region96: #{tpu_custom_call.1} parent=1 // pred_region
      %1606 = vsyncadd [#allocation4], 0
      %s1608 = sshll.u32 [#allocation16], 4
      %s1609 = int_to_ptr.vmem [resolvable:$true] %s1608
      %s1610 = sshll.u32 %s15, 4
      %s1611 = int_to_ptr.hbm [resolvable:$true] %s1610
      %1613 = dma.vmem_to_hbm [thread:$0]  %s1609, 128, %s1611, [#allocation4]
    $region97: #{tpu_custom_call.1} parent=1 // pred_fallthru
      _
    // Predicated region
    $region98: #{tpu_custom_call.1} parent=1 // pred_check
      _
    $region99: #{tpu_custom_call.1} parent=1 // pred_check_branch
      %1615 = sbr.rel (0) target = $region101
    $region100: #{tpu_custom_call.1} parent=1 // pred_region
      %1617 = dma.done [#allocation4], 128
    $region101: #{tpu_custom_call.1} parent=1 // pred_fallthru
      _
    %1618 = vsyncpa [#allocation3], 1
    %1619 = vsyncpa [#allocation6], 1
    %1620 = vsyncpa [#allocation9], 1
    %1621 = vsyncpa [#allocation12], 1
    %1622 = vsyncpa [#allocation15], 1
    %1623 = vsyncpa [#allocation4], 1

</llo_original>
